<compile_context>
chip_gen: v6e
topology: v6e:2x2x1
jax: 0.10.0
libtpu: 0.0.40
codegen_flags: <defaults>
</compile_context>

<pallas_src>
import numpy as np
import jax
import jax.numpy as jnp
from jax import lax
from jax.experimental import pallas as pl
from jax.experimental.pallas import tpu as pltpu

DIM_INPUT = 40   # dim_input of MyVariableRNN
H1 = 32          # fc1 out_features
H2 = 16          # GRU hidden_size
NOUT = 2         # fc2 out_features

BT = 128         # batch tile (lane width)
PH1_CHUNK = 32   # static time-chunk for the non-recurrent projection pass
UNROLL_T = 32    # below this, fully unroll the recurrence (static slices)


# ----------------------------- Pallas kernel ----------------------------- #
def gru_kernel(len_ref, x_ref, w1t_ref, b1_ref, wit_ref, bi_ref,
               wht_ref, bhn_ref, w2l_ref, b2l_ref, out_ref, gates_ref):
    T, Bt = out_ref.shape
    G3, H = wht_ref.shape                      # (3H, H) = (48, 16)

    # ---------------- Phase 1 (non-recurrent, feature-major) ----------------
    # fc1 + tanh + input-side GRU projections for ALL timesteps as bulk streaming matmuls over
    # (D, chunk*Bt) column slabs.  Biases (b_ir+b_hr, b_iz+b_hz, b_in) are folded in here.
    w1t = w1t_ref[...]                         # (H1, D)   bf16
    wit = wit_ref[...]                         # (3H, H1)  bf16
    b1c = b1_ref[...]                          # (H1, 1)   f32
    bic = bi_ref[...]                          # (3H, 1)   f32
    tc = min(T, PH1_CHUNK)
    for c in range(0, T, tc):
        c0, c1 = c * Bt, min(c + tc, T) * Bt
        xc = x_ref[0, :, c0:c1]                                                  # (D, w) bf16
        a1 = jnp.tanh(jnp.dot(w1t, xc, preferred_element_type=jnp.float32) + b1c)
        gates_ref[:, c0:c1] = (
            jnp.dot(wit, a1.astype(wit.dtype), preferred_element_type=jnp.float32) + bic)

    # ---------------- Phase 2 (serial GRU recurrence + folded fc2) ----------
    wht = wht_ref[...]                                        # (3H, H) f32
    # Hoisted loop-invariant broadcasts (JAX does not CSE broadcast_in_dim inside loops).
    bhn_b = jnp.broadcast_to(bhn_ref[...], (H, Bt))
    w2l_b = jnp.broadcast_to(w2l_ref[...], (H, Bt))
    b2l_b = jnp.broadcast_to(b2l_ref[...], (1, Bt))
    lens = len_ref[...]                                       # (1, Bt) int32

    def step(t, h, gx):
        # h, gx feature-major: (H, Bt) / (3H, Bt); gate slices are sublane slices.
        # NOTE(v5e/v6e): gh could instead be K=H broadcast multiply-adds on the VPU to skip the
        # MRF pop latency on the serial chain; the MXU form is kept (best on v7x, fine everywhere).
        gh = jnp.dot(wht, h, preferred_element_type=jnp.float32)                 # (3H, Bt)
        r = jax.nn.sigmoid(gx[0:H, :] + gh[0:H, :])
        z = jax.nn.sigmoid(gx[H:2 * H, :] + gh[H:2 * H, :])
        n = jnp.tanh(gx[2 * H:3 * H, :] + r * (gh[2 * H:3 * H, :] + bhn_b))
        h_new = (1.0 - z) * n + z * h
        # fc2 restricted to its consumed (last) output feature, folded into the step:
        # sublane reduce + masked lane-dense row store (padded steps -> fc2 bias). No hs scratch.
        proj = jnp.sum(w2l_b * h_new, axis=0, keepdims=True)                     # (1, Bt)
        mask = (t < lens).astype(jnp.float32)
        out_ref[pl.ds(t, 1), :] = mask * proj + b2l_b
        return h_new

    h0 = jnp.zeros((H, Bt), jnp.float32)
    if T <= UNROLL_T:
        # Small static T: full unroll with static, 128-aligned lane slices of the gates scratch.
        h = h0
        for t in range(T):
            h = step(t, h, gates_ref[:, t * Bt:(t + 1) * Bt])
    else:
        # Larger T: partially-unrolled fori_loop; per-step gates come from an aligned dynamic
        # lane slice (start is a multiple of 128).
        def body(t, h):
            col = pl.multiple_of(t * Bt, 128)
            return step(t, h, gates_ref[:, pl.ds(col, Bt)])
        _ = lax.fori_loop(0, T, body, h0, unroll=8)


# ----------------------------- Wrapper ----------------------------------- #
def my_variable_rnn(seqs, lengths, params):
    """seqs: (B, T, D) float; lengths: (B,) int (sorted descending, as pack_padded requires).

    Returns (B, T_max), T_max = max(lengths), matching
    fc2(pad_packed(GRU(pack(tanh(fc1(seqs))))))[:, :, -1].
    """
    B, T, D = seqs.shape
    lengths_np = np.asarray(lengths)
    # TODO(synk): t_max comes from concrete lengths at trace time (one compile per distinct max
    # length); the wrapper is not jit-traceable over `lengths`, mirroring pack_padded_sequence's
    # dependence on concrete lengths.
    t_max = int(lengths_np.max())

    bt = BT
    nb = (B + bt - 1) // bt
    b_pad = nb * bt
    # TODO(synk): when nb == 1 on v7x the second TensorCore idles; splitting into two 64-lane
    # batch blocks trades lane density for the extra core -- not worth it at these sizes.

    # Feature-major, time-major-within-block input: X[b] is (D, t_max*bt) with column index
    # t*bt + b_local, so Phase 1 is a streaming matmul per projection and the gates land directly
    # in the (3H, Bt)-per-step layout the recurrence wants (no in-kernel transposes).
    x = seqs[:, :t_max, :].astype(jnp.bfloat16)                 # bf16 storage: halves seqs DMA
    if b_pad != B:
        x = jnp.pad(x, ((0, b_pad - B), (0, 0), (0, 0)))
    x = x.reshape(nb, bt, t_max, D)
    x = jnp.transpose(x, (0, 3, 2, 1)).reshape(nb, D, t_max * bt)

    lens = jnp.asarray(lengths_np, jnp.int32)
    if b_pad != B:
        lens = jnp.pad(lens, (0, b_pad - B))
    lens2d = lens.reshape(1, b_pad)

    p = params
    # Fused / folded, feature-major parameters (host-side, once).
    w1t = jnp.transpose(p["w1"]).astype(jnp.bfloat16)                                   # (32, D)
    b1c = jnp.transpose(p["b1"])                                                        # (32, 1)
    wit = jnp.transpose(jnp.concatenate([p["wir"], p["wiz"], p["win"]], axis=1)
                        ).astype(jnp.bfloat16)                                          # (48, 32)
    bic = jnp.transpose(jnp.concatenate(
        [p["bir"] + p["bhr"], p["biz"] + p["bhz"], p["bin"]], axis=1))                  # (48, 1)
    wht = jnp.transpose(jnp.concatenate([p["whr"], p["whz"], p["whn"]], axis=1))        # (48, 16)
    bhnc = jnp.transpose(p["bhn"])                                                      # (16, 1)
    w2lc = p["w2"][:, -1].reshape(H2, 1)                                                # (16, 1)
    b2l = p["b2"][:, -1].reshape(1, 1)                                                  # (1, 1)

    def wspec(arr):                  # full-array, grid-invariant weight block
        return pl.BlockSpec(arr.shape, lambda b: (0, 0))

    # VMEM budget: double-buffered bf16 input block + f32 gates scratch + output (+ headroom).
    d_pad = -(-D // 16) * 16
    x_blk = d_pad * t_max * bt * 2
    gates_blk = 3 * H2 * t_max * bt * 4
    out_blk = t_max * bt * 4
    vmem_limit = int(min(2 * x_blk + gates_blk + 2 * out_blk + (8 << 20), 64 << 20))
    # TODO(synk): for t_max large enough that this exceeds ~64 MiB (v7x physical VMEM), chunk the
    # T axis of the gates scratch with a 2-deep window (pltpu.emit_pipeline) instead.

    out_tb = pl.pallas_call(
        gru_kernel,
        out_shape=jax.ShapeDtypeStruct((t_max, b_pad), jnp.float32),
        grid=(nb,),
        in_specs=[
            pl.BlockSpec((1, bt), lambda b: (0, b)),                  # lengths
            pl.BlockSpec((1, D, t_max * bt), lambda b: (b, 0, 0)),    # feature-major inputs
            wspec(w1t), wspec(b1c), wspec(wit), wspec(bic),
            wspec(wht), wspec(bhnc), wspec(w2lc), wspec(b2l),
        ],
        out_specs=pl.BlockSpec((t_max, bt), lambda b: (0, b)),
        scratch_shapes=[pltpu.VMEM((3 * H2, t_max * bt), jnp.float32)],   # feature-major gates
        compiler_params=pltpu.CompilerParams(
            dimension_semantics=("parallel",),
            vmem_limit_bytes=vmem_limit),
    )(lens2d, x, w1t, b1c, wit, bic, wht, bhnc, w2lc, b2l)

    return jnp.transpose(out_tb[:, :B])      # (B, T_max)


# ----------------------------- Params ------------------------------------ #
def init_params(key, dim_input=DIM_INPUT):
    ks = jax.random.split(key, 10)

    def unif(k, shape, fan_in):
        bound = 1.0 / np.sqrt(fan_in)
        return jax.random.uniform(k, shape, jnp.float32, -bound, bound)

    # fc1: Linear(dim_input, 32); stored transposed for x @ W
    w1 = unif(ks[0], (dim_input, H1), dim_input)
    b1 = unif(ks[1], (1, H1), dim_input)
    # GRU: weight_ih (3H, 32), weight_hh (3H, 16), gate order r, z, n
    w_ih = unif(ks[2], (3 * H2, H1), H2)
    w_hh = unif(ks[3], (3 * H2, H2), H2)
    b_ih = unif(ks[4], (3 * H2,), H2)
    b_hh = unif(ks[5], (3 * H2,), H2)
    # fc2: Linear(16, 2)
    w2 = unif(ks[6], (H2, NOUT), H2)
    b2 = unif(ks[7], (1, NOUT), H2)

    def gate(w, i):       # (H2, in) -> transposed (in, H2)
        return jnp.transpose(w[i * H2:(i + 1) * H2, :])

    def gbias(b, i):
        return b[i * H2:(i + 1) * H2].reshape(1, H2)

    return dict(
        w1=w1, b1=b1,
        wir=gate(w_ih, 0), wiz=gate(w_ih, 1), win=gate(w_ih, 2),
        whr=gate(w_hh, 0), whz=gate(w_hh, 1), whn=gate(w_hh, 2),
        bir=gbias(b_ih, 0), biz=gbias(b_ih, 1), bin=gbias(b_ih, 2),
        bhr=gbias(b_hh, 0), bhz=gbias(b_hh, 1), bhn=gbias(b_hh, 2),
        w2=w2, b2=b2,
    )


# ----------------------------- Pure-JAX reference ------------------------ #
def reference(seqs, lengths, p):
    B, T, D = seqs.shape
    t_max = int(np.max(np.asarray(lengths)))
    x = jnp.tanh(jnp.einsum("btd,dh->bth", seqs[:, :t_max, :], p["w1"]) + p["b1"][None])
    h = jnp.zeros((B, H2), jnp.float32)
    outs = []
    for t in range(t_max):
        xt = x[:, t, :]
        r = jax.nn.sigmoid(xt @ p["wir"] + p["bir"] + h @ p["whr"] + p["bhr"])
        z = jax.nn.sigmoid(xt @ p["wiz"] + p["biz"] + h @ p["whz"] + p["bhz"])
        n = jnp.tanh(xt @ p["win"] + p["bin"] + r * (h @ p["whn"] + p["bhn"]))
        h = (1.0 - z) * n + z * h
        m = (t < jnp.asarray(lengths)).astype(jnp.float32)[:, None]
        outs.append((h * m) @ p["w2"] + p["b2"])
    out = jnp.stack(outs, axis=1)   # (B, T_max, 2)
    return out[:, :, -1]


# ----------------------------- Main --------------------------------------- #
if __name__ == "__main__":
    key = jax.random.PRNGKey(0)
    kp, kx = jax.random.split(key)

    B, T = 4, 8
    params = init_params(kp, DIM_INPUT)
    seqs = jax.random.normal(kx, (B, T, DIM_INPUT), jnp.float32)
    lengths = np.array([8, 6, 5, 3], dtype=np.int32)   # sorted descending (pack_padded requirement)

    out = jax.block_until_ready(my_variable_rnn(seqs, lengths, params))
    ref = jax.block_until_ready(reference(seqs, lengths, params))

    # bf16-storage / default-MXU-precision kernel vs. the pure-JAX reference:
    # bf16-operand-rounding-class tolerance.
    np.testing.assert_allclose(np.asarray(out), np.asarray(ref), rtol=1e-2, atol=2e-3)

    print("KERNEL_OK")
</pallas_src>

<mosaic_0001>
module attributes {stable_mosaic.version = 11 : i64} {
  func.func @gru_kernel(%arg0: i32, %arg1: memref<1x128xi32, #tpu.memory_space<vmem>>, %arg2: memref<1x40x1024xbf16, #tpu.memory_space<vmem>>, %arg3: memref<32x40xbf16, #tpu.memory_space<vmem>>, %arg4: memref<32x1xf32, #tpu.memory_space<vmem>>, %arg5: memref<48x32xbf16, #tpu.memory_space<vmem>>, %arg6: memref<48x1xf32, #tpu.memory_space<vmem>>, %arg7: memref<48x16xf32, #tpu.memory_space<vmem>>, %arg8: memref<16x1xf32, #tpu.memory_space<vmem>>, %arg9: memref<16x1xf32, #tpu.memory_space<vmem>>, %arg10: memref<1x1xf32, #tpu.memory_space<vmem>>, %arg11: memref<8x128xf32, #tpu.memory_space<vmem>>, %arg12: memref<48x1024xf32, #tpu.memory_space<vmem>>) attributes {dimension_semantics = [#tpu.dimension_semantics<parallel>], iteration_bounds = array<i64: 1>, scalar_prefetch = 0 : i64, scratch_operands = 1 : i64, tpu.core_type = #tpu.core_type<tc>, window_params = [{transform_indices = @transform_0, window_bounds = array<i64: 1, 128>}, {transform_indices = @transform_1, window_bounds = array<i64: 1, 40, 1024>}, {pipeline_mode = #tpu.pipeline_mode<synchronous>, transform_indices = @transform_2, window_bounds = array<i64: 32, 40>}, {pipeline_mode = #tpu.pipeline_mode<synchronous>, transform_indices = @transform_3, window_bounds = array<i64: 32, 1>}, {pipeline_mode = #tpu.pipeline_mode<synchronous>, transform_indices = @transform_4, window_bounds = array<i64: 48, 32>}, {pipeline_mode = #tpu.pipeline_mode<synchronous>, transform_indices = @transform_5, window_bounds = array<i64: 48, 1>}, {pipeline_mode = #tpu.pipeline_mode<synchronous>, transform_indices = @transform_6, window_bounds = array<i64: 48, 16>}, {pipeline_mode = #tpu.pipeline_mode<synchronous>, transform_indices = @transform_7, window_bounds = array<i64: 16, 1>}, {pipeline_mode = #tpu.pipeline_mode<synchronous>, transform_indices = @transform_8, window_bounds = array<i64: 16, 1>}, {pipeline_mode = #tpu.pipeline_mode<synchronous>, transform_indices = @transform_9, window_bounds = array<i64: 1, 1>}, {transform_indices = @transform_10, window_bounds = array<i64: 8, 128>}]} {
    %c0 = arith.constant 0 : index
    %c0_0 = arith.constant 0 : index
    %0 = vector.load %arg3[%c0, %c0_0] : memref<32x40xbf16, #tpu.memory_space<vmem>>, vector<32x40xbf16>
    %c0_1 = arith.constant 0 : index
    %c0_2 = arith.constant 0 : index
    %1 = vector.load %arg5[%c0_1, %c0_2] : memref<48x32xbf16, #tpu.memory_space<vmem>>, vector<48x32xbf16>
    %c0_3 = arith.constant 0 : index
    %c0_4 = arith.constant 0 : index
    %2 = vector.load %arg4[%c0_3, %c0_4] : memref<32x1xf32, #tpu.memory_space<vmem>>, vector<32x1xf32>
    %c0_5 = arith.constant 0 : index
    %c0_6 = arith.constant 0 : index
    %3 = vector.load %arg6[%c0_5, %c0_6] : memref<48x1xf32, #tpu.memory_space<vmem>>, vector<48x1xf32>
    %c0_7 = arith.constant 0 : index
    %c0_8 = arith.constant 0 : index
    %c0_9 = arith.constant 0 : index
    %4 = vector.load %arg2[%c0_7, %c0_8, %c0_9] : memref<1x40x1024xbf16, #tpu.memory_space<vmem>>, vector<1x40x1024xbf16>
    %5 = vector.shape_cast %4 : vector<1x40x1024xbf16> to vector<40x1024xbf16>
    %cst = arith.constant dense<0.000000e+00> : vector<32x1024xf32>
    %6 = tpu.matmul %0, %5, %cst {dimension_numbers = #tpu.dot_dimension_numbers<[1], [0], [0], [1], [0, 0, 1, 1], [], []>} : vector<32x40xbf16>, vector<40x1024xbf16>, vector<32x1024xf32> -> vector<32x1024xf32>
    %7 = vector.broadcast %2 : vector<32x1xf32> to vector<32x1024xf32>
    %8 = arith.addf %6, %7 : vector<32x1024xf32>
    %9 = math.tanh %8 : vector<32x1024xf32>
    %10 = arith.truncf %9 : vector<32x1024xf32> to vector<32x1024xbf16>
    %cst_10 = arith.constant dense<0.000000e+00> : vector<48x1024xf32>
    %11 = tpu.matmul %1, %10, %cst_10 {dimension_numbers = #tpu.dot_dimension_numbers<[1], [0], [0], [1], [0, 0, 1, 1], [], []>} : vector<48x32xbf16>, vector<32x1024xbf16>, vector<48x1024xf32> -> vector<48x1024xf32>
    %12 = vector.broadcast %3 : vector<48x1xf32> to vector<48x1024xf32>
    %13 = arith.addf %11, %12 : vector<48x1024xf32>
    %c0_11 = arith.constant 0 : index
    %c0_12 = arith.constant 0 : index
    %14 = vector.load %arg12[%c0_11, %c0_12] : memref<48x1024xf32, #tpu.memory_space<vmem>>, vector<48x1024xf32>
    tpu.vector_store %arg12[%c0_11, %c0_12], %13 {strides = array<i32>} : memref<48x1024xf32, #tpu.memory_space<vmem>>, vector<48x1024xf32>,
    %c0_13 = arith.constant 0 : index
    %c0_14 = arith.constant 0 : index
    %15 = vector.load %arg7[%c0_13, %c0_14] : memref<48x16xf32, #tpu.memory_space<vmem>>, vector<48x16xf32>
    %c0_15 = arith.constant 0 : index
    %c0_16 = arith.constant 0 : index
    %16 = vector.load %arg8[%c0_15, %c0_16] : memref<16x1xf32, #tpu.memory_space<vmem>>, vector<16x1xf32>
    %17 = vector.shape_cast %16 : vector<16x1xf32> to vector<16x1xf32>
    %18 = vector.broadcast %17 : vector<16x1xf32> to vector<16x128xf32>
    %c0_17 = arith.constant 0 : index
    %c0_18 = arith.constant 0 : index
    %19 = vector.load %arg9[%c0_17, %c0_18] : memref<16x1xf32, #tpu.memory_space<vmem>>, vector<16x1xf32>
    %20 = vector.shape_cast %19 : vector<16x1xf32> to vector<16x1xf32>
    %21 = vector.broadcast %20 : vector<16x1xf32> to vector<16x128xf32>
    %c0_19 = arith.constant 0 : index
    %c0_20 = arith.constant 0 : index
    %22 = vector.load %arg10[%c0_19, %c0_20] : memref<1x1xf32, #tpu.memory_space<vmem>>, vector<1x1xf32>
    %23 = vector.shape_cast %22 : vector<1x1xf32> to vector<1x1xf32>
    %24 = vector.broadcast %23 : vector<1x1xf32> to vector<1x128xf32>
    %c0_21 = arith.constant 0 : index
    %c0_22 = arith.constant 0 : index
    %25 = vector.load %arg1[%c0_21, %c0_22] : memref<1x128xi32, #tpu.memory_space<vmem>>, vector<1x128xi32>
    %cst_23 = arith.constant 0.000000e+00 : f32
    %26 = vector.broadcast %cst_23 : f32 to vector<16x128xf32>
    %c0_24 = arith.constant 0 : index
    %c0_25 = arith.constant 0 : index
    %27 = vector.load %arg12[%c0_24, %c0_25] : memref<48x1024xf32, #tpu.memory_space<vmem>>, vector<48x128xf32>
    %cst_26 = arith.constant dense<0.000000e+00> : vector<48x128xf32>
    %28 = tpu.matmul %15, %26, %cst_26 {dimension_numbers = #tpu.dot_dimension_numbers<[1], [0], [0], [1], [0, 0, 1, 1], [], []>} : vector<48x16xf32>, vector<16x128xf32>, vector<48x128xf32> -> vector<48x128xf32>
    %29 = vector.extract_strided_slice %27 {offsets = [0, 0], sizes = [16, 128], strides = [1, 1]} : vector<48x128xf32> to vector<16x128xf32>
    %30 = vector.extract_strided_slice %28 {offsets = [0, 0], sizes = [16, 128], strides = [1, 1]} : vector<48x128xf32> to vector<16x128xf32>
    %31 = arith.addf %29, %30 : vector<16x128xf32>
    %32 = arith.negf %31 : vector<16x128xf32>
    %33 = math.exp %32 : vector<16x128xf32>
    %cst_27 = arith.constant 1.000000e+00 : f32
    %34 = vector.broadcast %cst_27 : f32 to vector<16x128xf32>
    %35 = arith.addf %34, %33 : vector<16x128xf32>
    %36 = arith.divf %34, %35 : vector<16x128xf32>
    %37 = vector.extract_strided_slice %27 {offsets = [16, 0], sizes = [16, 128], strides = [1, 1]} : vector<48x128xf32> to vector<16x128xf32>
    %38 = vector.extract_strided_slice %28 {offsets = [16, 0], sizes = [16, 128], strides = [1, 1]} : vector<48x128xf32> to vector<16x128xf32>
    %39 = arith.addf %37, %38 : vector<16x128xf32>
    %40 = arith.negf %39 : vector<16x128xf32>
    %41 = math.exp %40 : vector<16x128xf32>
    %cst_28 = arith.constant 1.000000e+00 : f32
    %42 = vector.broadcast %cst_28 : f32 to vector<16x128xf32>
    %43 = arith.addf %42, %41 : vector<16x128xf32>
    %44 = arith.divf %42, %43 : vector<16x128xf32>
    %45 = vector.extract_strided_slice %27 {offsets = [32, 0], sizes = [16, 128], strides = [1, 1]} : vector<48x128xf32> to vector<16x128xf32>
    %46 = vector.extract_strided_slice %28 {offsets = [32, 0], sizes = [16, 128], strides = [1, 1]} : vector<48x128xf32> to vector<16x128xf32>
    %47 = arith.addf %46, %18 : vector<16x128xf32>
    %48 = arith.mulf %36, %47 : vector<16x128xf32>
    %49 = arith.addf %45, %48 : vector<16x128xf32>
    %50 = math.tanh %49 : vector<16x128xf32>
    %cst_29 = arith.constant 1.000000e+00 : f32
    %51 = vector.broadcast %cst_29 : f32 to vector<16x128xf32>
    %52 = arith.subf %51, %44 : vector<16x128xf32>
    %53 = arith.mulf %52, %50 : vector<16x128xf32>
    %54 = arith.mulf %44, %26 : vector<16x128xf32>
    %55 = arith.addf %53, %54 : vector<16x128xf32>
    %56 = arith.mulf %21, %55 : vector<16x128xf32>
    %cst_30 = arith.constant dense<0.000000e+00> : vector<128xf32>
    %57 = vector.multi_reduction <add>, %56, %cst_30 [0] : vector<16x128xf32> to vector<128xf32>
    %58 = vector.shape_cast %57 : vector<128xf32> to vector<1x128xf32>
    %c0_i32 = arith.constant 0 : i32
    %59 = vector.broadcast %c0_i32 : i32 to vector<1x128xi32>
    %60 = arith.cmpi sgt, %25, %59 : vector<1x128xi32>
    %61 = arith.extui %60 : vector<1x128xi1> to vector<1x128xi32>
    %62 = arith.sitofp %61 : vector<1x128xi32> to vector<1x128xf32>
    %63 = arith.mulf %62, %58 : vector<1x128xf32>
    %64 = arith.addf %63, %24 : vector<1x128xf32>
    %c0_31 = arith.constant 0 : index
    %c0_32 = arith.constant 0 : index
    %65 = vector.load %arg11[%c0_31, %c0_32] : memref<8x128xf32, #tpu.memory_space<vmem>>, vector<1x128xf32>
    tpu.vector_store %arg11[%c0_31, %c0_32], %64 {strides = array<i32>} : memref<8x128xf32, #tpu.memory_space<vmem>>, vector<1x128xf32>,
    %c0_33 = arith.constant 0 : index
    %c128 = arith.constant 128 : index
    %66 = vector.load %arg12[%c0_33, %c128] : memref<48x1024xf32, #tpu.memory_space<vmem>>, vector<48x128xf32>
    %cst_34 = arith.constant dense<0.000000e+00> : vector<48x128xf32>
    %67 = tpu.matmul %15, %55, %cst_34 {dimension_numbers = #tpu.dot_dimension_numbers<[1], [0], [0], [1], [0, 0, 1, 1], [], []>} : vector<48x16xf32>, vector<16x128xf32>, vector<48x128xf32> -> vector<48x128xf32>
    %68 = vector.extract_strided_slice %66 {offsets = [0, 0], sizes = [16, 128], strides = [1, 1]} : vector<48x128xf32> to vector<16x128xf32>
    %69 = vector.extract_strided_slice %67 {offsets = [0, 0], sizes = [16, 128], strides = [1, 1]} : vector<48x128xf32> to vector<16x128xf32>
    %70 = arith.addf %68, %69 : vector<16x128xf32>
    %71 = arith.negf %70 : vector<16x128xf32>
    %72 = math.exp %71 : vector<16x128xf32>
    %cst_35 = arith.constant 1.000000e+00 : f32
    %73 = vector.broadcast %cst_35 : f32 to vector<16x128xf32>
    %74 = arith.addf %73, %72 : vector<16x128xf32>
    %75 = arith.divf %73, %74 : vector<16x128xf32>
    %76 = vector.extract_strided_slice %66 {offsets = [16, 0], sizes = [16, 128], strides = [1, 1]} : vector<48x128xf32> to vector<16x128xf32>
    %77 = vector.extract_strided_slice %67 {offsets = [16, 0], sizes = [16, 128], strides = [1, 1]} : vector<48x128xf32> to vector<16x128xf32>
    %78 = arith.addf %76, %77 : vector<16x128xf32>
    %79 = arith.negf %78 : vector<16x128xf32>
    %80 = math.exp %79 : vector<16x128xf32>
    %cst_36 = arith.constant 1.000000e+00 : f32
    %81 = vector.broadcast %cst_36 : f32 to vector<16x128xf32>
    %82 = arith.addf %81, %80 : vector<16x128xf32>
    %83 = arith.divf %81, %82 : vector<16x128xf32>
    %84 = vector.extract_strided_slice %66 {offsets = [32, 0], sizes = [16, 128], strides = [1, 1]} : vector<48x128xf32> to vector<16x128xf32>
    %85 = vector.extract_strided_slice %67 {offsets = [32, 0], sizes = [16, 128], strides = [1, 1]} : vector<48x128xf32> to vector<16x128xf32>
    %86 = arith.addf %85, %18 : vector<16x128xf32>
    %87 = arith.mulf %75, %86 : vector<16x128xf32>
    %88 = arith.addf %84, %87 : vector<16x128xf32>
    %89 = math.tanh %88 : vector<16x128xf32>
    %cst_37 = arith.constant 1.000000e+00 : f32
    %90 = vector.broadcast %cst_37 : f32 to vector<16x128xf32>
    %91 = arith.subf %90, %83 : vector<16x128xf32>
    %92 = arith.mulf %91, %89 : vector<16x128xf32>
    %93 = arith.mulf %83, %55 : vector<16x128xf32>
    %94 = arith.addf %92, %93 : vector<16x128xf32>
    %95 = arith.mulf %21, %94 : vector<16x128xf32>
    %cst_38 = arith.constant dense<0.000000e+00> : vector<128xf32>
    %96 = vector.multi_reduction <add>, %95, %cst_38 [0] : vector<16x128xf32> to vector<128xf32>
    %97 = vector.shape_cast %96 : vector<128xf32> to vector<1x128xf32>
    %c1_i32 = arith.constant 1 : i32
    %98 = vector.broadcast %c1_i32 : i32 to vector<1x128xi32>
    %99 = arith.cmpi sgt, %25, %98 : vector<1x128xi32>
    %100 = arith.extui %99 : vector<1x128xi1> to vector<1x128xi32>
    %101 = arith.sitofp %100 : vector<1x128xi32> to vector<1x128xf32>
    %102 = arith.mulf %101, %97 : vector<1x128xf32>
    %103 = arith.addf %102, %24 : vector<1x128xf32>
    %c1 = arith.constant 1 : index
    %c0_39 = arith.constant 0 : index
    %104 = vector.load %arg11[%c1, %c0_39] : memref<8x128xf32, #tpu.memory_space<vmem>>, vector<1x128xf32>
    tpu.vector_store %arg11[%c1, %c0_39], %103 {strides = array<i32>} : memref<8x128xf32, #tpu.memory_space<vmem>>, vector<1x128xf32>,
    %c0_40 = arith.constant 0 : index
    %c256 = arith.constant 256 : index
    %105 = vector.load %arg12[%c0_40, %c256] : memref<48x1024xf32, #tpu.memory_space<vmem>>, vector<48x128xf32>
    %cst_41 = arith.constant dense<0.000000e+00> : vector<48x128xf32>
    %106 = tpu.matmul %15, %94, %cst_41 {dimension_numbers = #tpu.dot_dimension_numbers<[1], [0], [0], [1], [0, 0, 1, 1], [], []>} : vector<48x16xf32>, vector<16x128xf32>, vector<48x128xf32> -> vector<48x128xf32>
    %107 = vector.extract_strided_slice %105 {offsets = [0, 0], sizes = [16, 128], strides = [1, 1]} : vector<48x128xf32> to vector<16x128xf32>
    %108 = vector.extract_strided_slice %106 {offsets = [0, 0], sizes = [16, 128], strides = [1, 1]} : vector<48x128xf32> to vector<16x128xf32>
    %109 = arith.addf %107, %108 : vector<16x128xf32>
    %110 = arith.negf %109 : vector<16x128xf32>
    %111 = math.exp %110 : vector<16x128xf32>
    %cst_42 = arith.constant 1.000000e+00 : f32
    %112 = vector.broadcast %cst_42 : f32 to vector<16x128xf32>
    %113 = arith.addf %112, %111 : vector<16x128xf32>
    %114 = arith.divf %112, %113 : vector<16x128xf32>
    %115 = vector.extract_strided_slice %105 {offsets = [16, 0], sizes = [16, 128], strides = [1, 1]} : vector<48x128xf32> to vector<16x128xf32>
    %116 = vector.extract_strided_slice %106 {offsets = [16, 0], sizes = [16, 128], strides = [1, 1]} : vector<48x128xf32> to vector<16x128xf32>
    %117 = arith.addf %115, %116 : vector<16x128xf32>
    %118 = arith.negf %117 : vector<16x128xf32>
    %119 = math.exp %118 : vector<16x128xf32>
    %cst_43 = arith.constant 1.000000e+00 : f32
    %120 = vector.broadcast %cst_43 : f32 to vector<16x128xf32>
    %121 = arith.addf %120, %119 : vector<16x128xf32>
    %122 = arith.divf %120, %121 : vector<16x128xf32>
    %123 = vector.extract_strided_slice %105 {offsets = [32, 0], sizes = [16, 128], strides = [1, 1]} : vector<48x128xf32> to vector<16x128xf32>
    %124 = vector.extract_strided_slice %106 {offsets = [32, 0], sizes = [16, 128], strides = [1, 1]} : vector<48x128xf32> to vector<16x128xf32>
    %125 = arith.addf %124, %18 : vector<16x128xf32>
    %126 = arith.mulf %114, %125 : vector<16x128xf32>
    %127 = arith.addf %123, %126 : vector<16x128xf32>
    %128 = math.tanh %127 : vector<16x128xf32>
    %cst_44 = arith.constant 1.000000e+00 : f32
    %129 = vector.broadcast %cst_44 : f32 to vector<16x128xf32>
    %130 = arith.subf %129, %122 : vector<16x128xf32>
    %131 = arith.mulf %130, %128 : vector<16x128xf32>
    %132 = arith.mulf %122, %94 : vector<16x128xf32>
    %133 = arith.addf %131, %132 : vector<16x128xf32>
    %134 = arith.mulf %21, %133 : vector<16x128xf32>
    %cst_45 = arith.constant dense<0.000000e+00> : vector<128xf32>
    %135 = vector.multi_reduction <add>, %134, %cst_45 [0] : vector<16x128xf32> to vector<128xf32>
    %136 = vector.shape_cast %135 : vector<128xf32> to vector<1x128xf32>
    %c2_i32 = arith.constant 2 : i32
    %137 = vector.broadcast %c2_i32 : i32 to vector<1x128xi32>
    %138 = arith.cmpi sgt, %25, %137 : vector<1x128xi32>
    %139 = arith.extui %138 : vector<1x128xi1> to vector<1x128xi32>
    %140 = arith.sitofp %139 : vector<1x128xi32> to vector<1x128xf32>
    %141 = arith.mulf %140, %136 : vector<1x128xf32>
    %142 = arith.addf %141, %24 : vector<1x128xf32>
    %c2 = arith.constant 2 : index
    %c0_46 = arith.constant 0 : index
    %143 = vector.load %arg11[%c2, %c0_46] : memref<8x128xf32, #tpu.memory_space<vmem>>, vector<1x128xf32>
    tpu.vector_store %arg11[%c2, %c0_46], %142 {strides = array<i32>} : memref<8x128xf32, #tpu.memory_space<vmem>>, vector<1x128xf32>,
    %c0_47 = arith.constant 0 : index
    %c384 = arith.constant 384 : index
    %144 = vector.load %arg12[%c0_47, %c384] : memref<48x1024xf32, #tpu.memory_space<vmem>>, vector<48x128xf32>
    %cst_48 = arith.constant dense<0.000000e+00> : vector<48x128xf32>
    %145 = tpu.matmul %15, %133, %cst_48 {dimension_numbers = #tpu.dot_dimension_numbers<[1], [0], [0], [1], [0, 0, 1, 1], [], []>} : vector<48x16xf32>, vector<16x128xf32>, vector<48x128xf32> -> vector<48x128xf32>
    %146 = vector.extract_strided_slice %144 {offsets = [0, 0], sizes = [16, 128], strides = [1, 1]} : vector<48x128xf32> to vector<16x128xf32>
    %147 = vector.extract_strided_slice %145 {offsets = [0, 0], sizes = [16, 128], strides = [1, 1]} : vector<48x128xf32> to vector<16x128xf32>
    %148 = arith.addf %146, %147 : vector<16x128xf32>
    %149 = arith.negf %148 : vector<16x128xf32>
    %150 = math.exp %149 : vector<16x128xf32>
    %cst_49 = arith.constant 1.000000e+00 : f32
    %151 = vector.broadcast %cst_49 : f32 to vector<16x128xf32>
    %152 = arith.addf %151, %150 : vector<16x128xf32>
    %153 = arith.divf %151, %152 : vector<16x128xf32>
    %154 = vector.extract_strided_slice %144 {offsets = [16, 0], sizes = [16, 128], strides = [1, 1]} : vector<48x128xf32> to vector<16x128xf32>
    %155 = vector.extract_strided_slice %145 {offsets = [16, 0], sizes = [16, 128], strides = [1, 1]} : vector<48x128xf32> to vector<16x128xf32>
    %156 = arith.addf %154, %155 : vector<16x128xf32>
    %157 = arith.negf %156 : vector<16x128xf32>
    %158 = math.exp %157 : vector<16x128xf32>
    %cst_50 = arith.constant 1.000000e+00 : f32
    %159 = vector.broadcast %cst_50 : f32 to vector<16x128xf32>
    %160 = arith.addf %159, %158 : vector<16x128xf32>
    %161 = arith.divf %159, %160 : vector<16x128xf32>
    %162 = vector.extract_strided_slice %144 {offsets = [32, 0], sizes = [16, 128], strides = [1, 1]} : vector<48x128xf32> to vector<16x128xf32>
    %163 = vector.extract_strided_slice %145 {offsets = [32, 0], sizes = [16, 128], strides = [1, 1]} : vector<48x128xf32> to vector<16x128xf32>
    %164 = arith.addf %163, %18 : vector<16x128xf32>
    %165 = arith.mulf %153, %164 : vector<16x128xf32>
    %166 = arith.addf %162, %165 : vector<16x128xf32>
    %167 = math.tanh %166 : vector<16x128xf32>
    %cst_51 = arith.constant 1.000000e+00 : f32
    %168 = vector.broadcast %cst_51 : f32 to vector<16x128xf32>
    %169 = arith.subf %168, %161 : vector<16x128xf32>
    %170 = arith.mulf %169, %167 : vector<16x128xf32>
    %171 = arith.mulf %161, %133 : vector<16x128xf32>
    %172 = arith.addf %170, %171 : vector<16x128xf32>
    %173 = arith.mulf %21, %172 : vector<16x128xf32>
    %cst_52 = arith.constant dense<0.000000e+00> : vector<128xf32>
    %174 = vector.multi_reduction <add>, %173, %cst_52 [0] : vector<16x128xf32> to vector<128xf32>
    %175 = vector.shape_cast %174 : vector<128xf32> to vector<1x128xf32>
    %c3_i32 = arith.constant 3 : i32
    %176 = vector.broadcast %c3_i32 : i32 to vector<1x128xi32>
    %177 = arith.cmpi sgt, %25, %176 : vector<1x128xi32>
    %178 = arith.extui %177 : vector<1x128xi1> to vector<1x128xi32>
    %179 = arith.sitofp %178 : vector<1x128xi32> to vector<1x128xf32>
    %180 = arith.mulf %179, %175 : vector<1x128xf32>
    %181 = arith.addf %180, %24 : vector<1x128xf32>
    %c3 = arith.constant 3 : index
    %c0_53 = arith.constant 0 : index
    %182 = vector.load %arg11[%c3, %c0_53] : memref<8x128xf32, #tpu.memory_space<vmem>>, vector<1x128xf32>
    tpu.vector_store %arg11[%c3, %c0_53], %181 {strides = array<i32>} : memref<8x128xf32, #tpu.memory_space<vmem>>, vector<1x128xf32>,
    %c0_54 = arith.constant 0 : index
    %c512 = arith.constant 512 : index
    %183 = vector.load %arg12[%c0_54, %c512] : memref<48x1024xf32, #tpu.memory_space<vmem>>, vector<48x128xf32>
    %cst_55 = arith.constant dense<0.000000e+00> : vector<48x128xf32>
    %184 = tpu.matmul %15, %172, %cst_55 {dimension_numbers = #tpu.dot_dimension_numbers<[1], [0], [0], [1], [0, 0, 1, 1], [], []>} : vector<48x16xf32>, vector<16x128xf32>, vector<48x128xf32> -> vector<48x128xf32>
    %185 = vector.extract_strided_slice %183 {offsets = [0, 0], sizes = [16, 128], strides = [1, 1]} : vector<48x128xf32> to vector<16x128xf32>
    %186 = vector.extract_strided_slice %184 {offsets = [0, 0], sizes = [16, 128], strides = [1, 1]} : vector<48x128xf32> to vector<16x128xf32>
    %187 = arith.addf %185, %186 : vector<16x128xf32>
    %188 = arith.negf %187 : vector<16x128xf32>
    %189 = math.exp %188 : vector<16x128xf32>
    %cst_56 = arith.constant 1.000000e+00 : f32
    %190 = vector.broadcast %cst_56 : f32 to vector<16x128xf32>
    %191 = arith.addf %190, %189 : vector<16x128xf32>
    %192 = arith.divf %190, %191 : vector<16x128xf32>
    %193 = vector.extract_strided_slice %183 {offsets = [16, 0], sizes = [16, 128], strides = [1, 1]} : vector<48x128xf32> to vector<16x128xf32>
    %194 = vector.extract_strided_slice %184 {offsets = [16, 0], sizes = [16, 128], strides = [1, 1]} : vector<48x128xf32> to vector<16x128xf32>
    %195 = arith.addf %193, %194 : vector<16x128xf32>
    %196 = arith.negf %195 : vector<16x128xf32>
    %197 = math.exp %196 : vector<16x128xf32>
    %cst_57 = arith.constant 1.000000e+00 : f32
    %198 = vector.broadcast %cst_57 : f32 to vector<16x128xf32>
    %199 = arith.addf %198, %197 : vector<16x128xf32>
    %200 = arith.divf %198, %199 : vector<16x128xf32>
    %201 = vector.extract_strided_slice %183 {offsets = [32, 0], sizes = [16, 128], strides = [1, 1]} : vector<48x128xf32> to vector<16x128xf32>
    %202 = vector.extract_strided_slice %184 {offsets = [32, 0], sizes = [16, 128], strides = [1, 1]} : vector<48x128xf32> to vector<16x128xf32>
    %203 = arith.addf %202, %18 : vector<16x128xf32>
    %204 = arith.mulf %192, %203 : vector<16x128xf32>
    %205 = arith.addf %201, %204 : vector<16x128xf32>
    %206 = math.tanh %205 : vector<16x128xf32>
    %cst_58 = arith.constant 1.000000e+00 : f32
    %207 = vector.broadcast %cst_58 : f32 to vector<16x128xf32>
    %208 = arith.subf %207, %200 : vector<16x128xf32>
    %209 = arith.mulf %208, %206 : vector<16x128xf32>
    %210 = arith.mulf %200, %172 : vector<16x128xf32>
    %211 = arith.addf %209, %210 : vector<16x128xf32>
    %212 = arith.mulf %21, %211 : vector<16x128xf32>
    %cst_59 = arith.constant dense<0.000000e+00> : vector<128xf32>
    %213 = vector.multi_reduction <add>, %212, %cst_59 [0] : vector<16x128xf32> to vector<128xf32>
    %214 = vector.shape_cast %213 : vector<128xf32> to vector<1x128xf32>
    %c4_i32 = arith.constant 4 : i32
    %215 = vector.broadcast %c4_i32 : i32 to vector<1x128xi32>
    %216 = arith.cmpi sgt, %25, %215 : vector<1x128xi32>
    %217 = arith.extui %216 : vector<1x128xi1> to vector<1x128xi32>
    %218 = arith.sitofp %217 : vector<1x128xi32> to vector<1x128xf32>
    %219 = arith.mulf %218, %214 : vector<1x128xf32>
    %220 = arith.addf %219, %24 : vector<1x128xf32>
    %c4 = arith.constant 4 : index
    %c0_60 = arith.constant 0 : index
    %221 = vector.load %arg11[%c4, %c0_60] : memref<8x128xf32, #tpu.memory_space<vmem>>, vector<1x128xf32>
    tpu.vector_store %arg11[%c4, %c0_60], %220 {strides = array<i32>} : memref<8x128xf32, #tpu.memory_space<vmem>>, vector<1x128xf32>,
    %c0_61 = arith.constant 0 : index
    %c640 = arith.constant 640 : index
    %222 = vector.load %arg12[%c0_61, %c640] : memref<48x1024xf32, #tpu.memory_space<vmem>>, vector<48x128xf32>
    %cst_62 = arith.constant dense<0.000000e+00> : vector<48x128xf32>
    %223 = tpu.matmul %15, %211, %cst_62 {dimension_numbers = #tpu.dot_dimension_numbers<[1], [0], [0], [1], [0, 0, 1, 1], [], []>} : vector<48x16xf32>, vector<16x128xf32>, vector<48x128xf32> -> vector<48x128xf32>
    %224 = vector.extract_strided_slice %222 {offsets = [0, 0], sizes = [16, 128], strides = [1, 1]} : vector<48x128xf32> to vector<16x128xf32>
    %225 = vector.extract_strided_slice %223 {offsets = [0, 0], sizes = [16, 128], strides = [1, 1]} : vector<48x128xf32> to vector<16x128xf32>
    %226 = arith.addf %224, %225 : vector<16x128xf32>
    %227 = arith.negf %226 : vector<16x128xf32>
    %228 = math.exp %227 : vector<16x128xf32>
    %cst_63 = arith.constant 1.000000e+00 : f32
    %229 = vector.broadcast %cst_63 : f32 to vector<16x128xf32>
    %230 = arith.addf %229, %228 : vector<16x128xf32>
    %231 = arith.divf %229, %230 : vector<16x128xf32>
    %232 = vector.extract_strided_slice %222 {offsets = [16, 0], sizes = [16, 128], strides = [1, 1]} : vector<48x128xf32> to vector<16x128xf32>
    %233 = vector.extract_strided_slice %223 {offsets = [16, 0], sizes = [16, 128], strides = [1, 1]} : vector<48x128xf32> to vector<16x128xf32>
    %234 = arith.addf %232, %233 : vector<16x128xf32>
    %235 = arith.negf %234 : vector<16x128xf32>
    %236 = math.exp %235 : vector<16x128xf32>
    %cst_64 = arith.constant 1.000000e+00 : f32
    %237 = vector.broadcast %cst_64 : f32 to vector<16x128xf32>
    %238 = arith.addf %237, %236 : vector<16x128xf32>
    %239 = arith.divf %237, %238 : vector<16x128xf32>
    %240 = vector.extract_strided_slice %222 {offsets = [32, 0], sizes = [16, 128], strides = [1, 1]} : vector<48x128xf32> to vector<16x128xf32>
    %241 = vector.extract_strided_slice %223 {offsets = [32, 0], sizes = [16, 128], strides = [1, 1]} : vector<48x128xf32> to vector<16x128xf32>
    %242 = arith.addf %241, %18 : vector<16x128xf32>
    %243 = arith.mulf %231, %242 : vector<16x128xf32>
    %244 = arith.addf %240, %243 : vector<16x128xf32>
    %245 = math.tanh %244 : vector<16x128xf32>
    %cst_65 = arith.constant 1.000000e+00 : f32
    %246 = vector.broadcast %cst_65 : f32 to vector<16x128xf32>
    %247 = arith.subf %246, %239 : vector<16x128xf32>
    %248 = arith.mulf %247, %245 : vector<16x128xf32>
    %249 = arith.mulf %239, %211 : vector<16x128xf32>
    %250 = arith.addf %248, %249 : vector<16x128xf32>
    %251 = arith.mulf %21, %250 : vector<16x128xf32>
    %cst_66 = arith.constant dense<0.000000e+00> : vector<128xf32>
    %252 = vector.multi_reduction <add>, %251, %cst_66 [0] : vector<16x128xf32> to vector<128xf32>
    %253 = vector.shape_cast %252 : vector<128xf32> to vector<1x128xf32>
    %c5_i32 = arith.constant 5 : i32
    %254 = vector.broadcast %c5_i32 : i32 to vector<1x128xi32>
    %255 = arith.cmpi sgt, %25, %254 : vector<1x128xi32>
    %256 = arith.extui %255 : vector<1x128xi1> to vector<1x128xi32>
    %257 = arith.sitofp %256 : vector<1x128xi32> to vector<1x128xf32>
    %258 = arith.mulf %257, %253 : vector<1x128xf32>
    %259 = arith.addf %258, %24 : vector<1x128xf32>
    %c5 = arith.constant 5 : index
    %c0_67 = arith.constant 0 : index
    %260 = vector.load %arg11[%c5, %c0_67] : memref<8x128xf32, #tpu.memory_space<vmem>>, vector<1x128xf32>
    tpu.vector_store %arg11[%c5, %c0_67], %259 {strides = array<i32>} : memref<8x128xf32, #tpu.memory_space<vmem>>, vector<1x128xf32>,
    %c0_68 = arith.constant 0 : index
    %c768 = arith.constant 768 : index
    %261 = vector.load %arg12[%c0_68, %c768] : memref<48x1024xf32, #tpu.memory_space<vmem>>, vector<48x128xf32>
    %cst_69 = arith.constant dense<0.000000e+00> : vector<48x128xf32>
    %262 = tpu.matmul %15, %250, %cst_69 {dimension_numbers = #tpu.dot_dimension_numbers<[1], [0], [0], [1], [0, 0, 1, 1], [], []>} : vector<48x16xf32>, vector<16x128xf32>, vector<48x128xf32> -> vector<48x128xf32>
    %263 = vector.extract_strided_slice %261 {offsets = [0, 0], sizes = [16, 128], strides = [1, 1]} : vector<48x128xf32> to vector<16x128xf32>
    %264 = vector.extract_strided_slice %262 {offsets = [0, 0], sizes = [16, 128], strides = [1, 1]} : vector<48x128xf32> to vector<16x128xf32>
    %265 = arith.addf %263, %264 : vector<16x128xf32>
    %266 = arith.negf %265 : vector<16x128xf32>
    %267 = math.exp %266 : vector<16x128xf32>
    %cst_70 = arith.constant 1.000000e+00 : f32
    %268 = vector.broadcast %cst_70 : f32 to vector<16x128xf32>
    %269 = arith.addf %268, %267 : vector<16x128xf32>
    %270 = arith.divf %268, %269 : vector<16x128xf32>
    %271 = vector.extract_strided_slice %261 {offsets = [16, 0], sizes = [16, 128], strides = [1, 1]} : vector<48x128xf32> to vector<16x128xf32>
    %272 = vector.extract_strided_slice %262 {offsets = [16, 0], sizes = [16, 128], strides = [1, 1]} : vector<48x128xf32> to vector<16x128xf32>
    %273 = arith.addf %271, %272 : vector<16x128xf32>
    %274 = arith.negf %273 : vector<16x128xf32>
    %275 = math.exp %274 : vector<16x128xf32>
    %cst_71 = arith.constant 1.000000e+00 : f32
    %276 = vector.broadcast %cst_71 : f32 to vector<16x128xf32>
    %277 = arith.addf %276, %275 : vector<16x128xf32>
    %278 = arith.divf %276, %277 : vector<16x128xf32>
    %279 = vector.extract_strided_slice %261 {offsets = [32, 0], sizes = [16, 128], strides = [1, 1]} : vector<48x128xf32> to vector<16x128xf32>
    %280 = vector.extract_strided_slice %262 {offsets = [32, 0], sizes = [16, 128], strides = [1, 1]} : vector<48x128xf32> to vector<16x128xf32>
    %281 = arith.addf %280, %18 : vector<16x128xf32>
    %282 = arith.mulf %270, %281 : vector<16x128xf32>
    %283 = arith.addf %279, %282 : vector<16x128xf32>
    %284 = math.tanh %283 : vector<16x128xf32>
    %cst_72 = arith.constant 1.000000e+00 : f32
    %285 = vector.broadcast %cst_72 : f32 to vector<16x128xf32>
    %286 = arith.subf %285, %278 : vector<16x128xf32>
    %287 = arith.mulf %286, %284 : vector<16x128xf32>
    %288 = arith.mulf %278, %250 : vector<16x128xf32>
    %289 = arith.addf %287, %288 : vector<16x128xf32>
    %290 = arith.mulf %21, %289 : vector<16x128xf32>
    %cst_73 = arith.constant dense<0.000000e+00> : vector<128xf32>
    %291 = vector.multi_reduction <add>, %290, %cst_73 [0] : vector<16x128xf32> to vector<128xf32>
    %292 = vector.shape_cast %291 : vector<128xf32> to vector<1x128xf32>
    %c6_i32 = arith.constant 6 : i32
    %293 = vector.broadcast %c6_i32 : i32 to vector<1x128xi32>
    %294 = arith.cmpi sgt, %25, %293 : vector<1x128xi32>
    %295 = arith.extui %294 : vector<1x128xi1> to vector<1x128xi32>
    %296 = arith.sitofp %295 : vector<1x128xi32> to vector<1x128xf32>
    %297 = arith.mulf %296, %292 : vector<1x128xf32>
    %298 = arith.addf %297, %24 : vector<1x128xf32>
    %c6 = arith.constant 6 : index
    %c0_74 = arith.constant 0 : index
    %299 = vector.load %arg11[%c6, %c0_74] : memref<8x128xf32, #tpu.memory_space<vmem>>, vector<1x128xf32>
    tpu.vector_store %arg11[%c6, %c0_74], %298 {strides = array<i32>} : memref<8x128xf32, #tpu.memory_space<vmem>>, vector<1x128xf32>,
    %c0_75 = arith.constant 0 : index
    %c896 = arith.constant 896 : index
    %300 = vector.load %arg12[%c0_75, %c896] : memref<48x1024xf32, #tpu.memory_space<vmem>>, vector<48x128xf32>
    %cst_76 = arith.constant dense<0.000000e+00> : vector<48x128xf32>
    %301 = tpu.matmul %15, %289, %cst_76 {dimension_numbers = #tpu.dot_dimension_numbers<[1], [0], [0], [1], [0, 0, 1, 1], [], []>} : vector<48x16xf32>, vector<16x128xf32>, vector<48x128xf32> -> vector<48x128xf32>
    %302 = vector.extract_strided_slice %300 {offsets = [0, 0], sizes = [16, 128], strides = [1, 1]} : vector<48x128xf32> to vector<16x128xf32>
    %303 = vector.extract_strided_slice %301 {offsets = [0, 0], sizes = [16, 128], strides = [1, 1]} : vector<48x128xf32> to vector<16x128xf32>
    %304 = arith.addf %302, %303 : vector<16x128xf32>
    %305 = arith.negf %304 : vector<16x128xf32>
    %306 = math.exp %305 : vector<16x128xf32>
    %cst_77 = arith.constant 1.000000e+00 : f32
    %307 = vector.broadcast %cst_77 : f32 to vector<16x128xf32>
    %308 = arith.addf %307, %306 : vector<16x128xf32>
    %309 = arith.divf %307, %308 : vector<16x128xf32>
    %310 = vector.extract_strided_slice %300 {offsets = [16, 0], sizes = [16, 128], strides = [1, 1]} : vector<48x128xf32> to vector<16x128xf32>
    %311 = vector.extract_strided_slice %301 {offsets = [16, 0], sizes = [16, 128], strides = [1, 1]} : vector<48x128xf32> to vector<16x128xf32>
    %312 = arith.addf %310, %311 : vector<16x128xf32>
    %313 = arith.negf %312 : vector<16x128xf32>
    %314 = math.exp %313 : vector<16x128xf32>
    %cst_78 = arith.constant 1.000000e+00 : f32
    %315 = vector.broadcast %cst_78 : f32 to vector<16x128xf32>
    %316 = arith.addf %315, %314 : vector<16x128xf32>
    %317 = arith.divf %315, %316 : vector<16x128xf32>
    %318 = vector.extract_strided_slice %300 {offsets = [32, 0], sizes = [16, 128], strides = [1, 1]} : vector<48x128xf32> to vector<16x128xf32>
    %319 = vector.extract_strided_slice %301 {offsets = [32, 0], sizes = [16, 128], strides = [1, 1]} : vector<48x128xf32> to vector<16x128xf32>
    %320 = arith.addf %319, %18 : vector<16x128xf32>
    %321 = arith.mulf %309, %320 : vector<16x128xf32>
    %322 = arith.addf %318, %321 : vector<16x128xf32>
    %323 = math.tanh %322 : vector<16x128xf32>
    %cst_79 = arith.constant 1.000000e+00 : f32
    %324 = vector.broadcast %cst_79 : f32 to vector<16x128xf32>
    %325 = arith.subf %324, %317 : vector<16x128xf32>
    %326 = arith.mulf %325, %323 : vector<16x128xf32>
    %327 = arith.mulf %317, %289 : vector<16x128xf32>
    %328 = arith.addf %326, %327 : vector<16x128xf32>
    %329 = arith.mulf %21, %328 : vector<16x128xf32>
    %cst_80 = arith.constant dense<0.000000e+00> : vector<128xf32>
    %330 = vector.multi_reduction <add>, %329, %cst_80 [0] : vector<16x128xf32> to vector<128xf32>
    %331 = vector.shape_cast %330 : vector<128xf32> to vector<1x128xf32>
    %c7_i32 = arith.constant 7 : i32
    %332 = vector.broadcast %c7_i32 : i32 to vector<1x128xi32>
    %333 = arith.cmpi sgt, %25, %332 : vector<1x128xi32>
    %334 = arith.extui %333 : vector<1x128xi1> to vector<1x128xi32>
    %335 = arith.sitofp %334 : vector<1x128xi32> to vector<1x128xf32>
    %336 = arith.mulf %335, %331 : vector<1x128xf32>
    %337 = arith.addf %336, %24 : vector<1x128xf32>
    %c7 = arith.constant 7 : index
    %c0_81 = arith.constant 0 : index
    %338 = vector.load %arg11[%c7, %c0_81] : memref<8x128xf32, #tpu.memory_space<vmem>>, vector<1x128xf32>
    tpu.vector_store %arg11[%c7, %c0_81], %337 {strides = array<i32>} : memref<8x128xf32, #tpu.memory_space<vmem>>, vector<1x128xf32>,
    return
  }
  func.func @transform_0(%arg0: i32) -> (i32, i32) {
    %c0_i32 = arith.constant 0 : i32
    %c0_i32_0 = arith.constant 0 : i32
    return %c0_i32, %arg0 : i32, i32
  }
  func.func @transform_1(%arg0: i32) -> (i32, i32, i32) {
    %c0_i32 = arith.constant 0 : i32
    %c0_i32_0 = arith.constant 0 : i32
    %c0_i32_1 = arith.constant 0 : i32
    return %arg0, %c0_i32, %c0_i32_0 : i32, i32, i32
  }
  func.func @transform_2(%arg0: i32) -> (i32, i32) {
    %c0_i32 = arith.constant 0 : i32
    %c0_i32_0 = arith.constant 0 : i32
    %c0_i32_1 = arith.constant 0 : i32
    return %c0_i32, %c0_i32_0 : i32, i32
  }
  func.func @transform_3(%arg0: i32) -> (i32, i32) {
    %c0_i32 = arith.constant 0 : i32
    %c0_i32_0 = arith.constant 0 : i32
    %c0_i32_1 = arith.constant 0 : i32
    return %c0_i32, %c0_i32_0 : i32, i32
  }
  func.func @transform_4(%arg0: i32) -> (i32, i32) {
    %c0_i32 = arith.constant 0 : i32
    %c0_i32_0 = arith.constant 0 : i32
    %c0_i32_1 = arith.constant 0 : i32
    return %c0_i32, %c0_i32_0 : i32, i32
  }
  func.func @transform_5(%arg0: i32) -> (i32, i32) {
    %c0_i32 = arith.constant 0 : i32
    %c0_i32_0 = arith.constant 0 : i32
    %c0_i32_1 = arith.constant 0 : i32
    return %c0_i32, %c0_i32_0 : i32, i32
  }
  func.func @transform_6(%arg0: i32) -> (i32, i32) {
    %c0_i32 = arith.constant 0 : i32
    %c0_i32_0 = arith.constant 0 : i32
    %c0_i32_1 = arith.constant 0 : i32
    return %c0_i32, %c0_i32_0 : i32, i32
  }
  func.func @transform_7(%arg0: i32) -> (i32, i32) {
    %c0_i32 = arith.constant 0 : i32
    %c0_i32_0 = arith.constant 0 : i32
    %c0_i32_1 = arith.constant 0 : i32
    return %c0_i32, %c0_i32_0 : i32, i32
  }
  func.func @transform_8(%arg0: i32) -> (i32, i32) {
    %c0_i32 = arith.constant 0 : i32
    %c0_i32_0 = arith.constant 0 : i32
    %c0_i32_1 = arith.constant 0 : i32
    return %c0_i32, %c0_i32_0 : i32, i32
  }
  func.func @transform_9(%arg0: i32) -> (i32, i32) {
    %c0_i32 = arith.constant 0 : i32
    %c0_i32_0 = arith.constant 0 : i32
    %c0_i32_1 = arith.constant 0 : i32
    return %c0_i32, %c0_i32_0 : i32, i32
  }
  func.func @transform_10(%arg0: i32) -> (i32, i32) {
    %c0_i32 = arith.constant 0 : i32
    %c0_i32_0 = arith.constant 0 : i32
    return %c0_i32, %arg0 : i32, i32
  }
}

</mosaic_0001>

<llo_original>
// kernel: tpu_custom_call.1
$region0: #{tpu_custom_call.1}
  #allocation0 [shape = 'u32[]', space=smem, size = 0x4, offset = 0x4, fixed_abs, tag = 'smem constant byte address 0x4 - core index']
  #allocation1 [shape = 'u32[144,128]{1,0:T(1,128)}', space=vmem, size = 0x12000, scoped, tag = 'internal scratch']
  #allocation2 [shape = 'f32[48,1024]{1,0:T(8,128)}', space=vmem, size = 0x30000, scoped, tag = 'scratch operand']
  #allocation3 [shape = 'f32[1,1]{1,0:T(1,128)S(1)}', space=vmem, size = 0x200, scoped, tag = 'scoped memory for tpu_custom_call.1']
  %s0 = inlined_call_operand.vmem [shape: s32[1,128], index: 0, kind: input, shape index: {}]
  %s1 = inlined_call_operand.vmem [shape: bf16[1,40,1024], index: 1, kind: input, shape index: {}]
  %s2 = inlined_call_operand.vmem [shape: bf16[32,40], index: 2, kind: input, shape index: {}]
  %s3 = inlined_call_operand.vmem [shape: f32[32,1], index: 3, kind: input, shape index: {}]
  %s4 = inlined_call_operand.vmem [shape: bf16[48,32], index: 4, kind: input, shape index: {}]
  %s5 = inlined_call_operand.vmem [shape: f32[48,1], index: 5, kind: input, shape index: {}]
  %s6 = inlined_call_operand.vmem [shape: f32[48,16], index: 6, kind: input, shape index: {}]
  %s7 = inlined_call_operand.vmem [shape: f32[16,1], index: 7, kind: input, shape index: {}]
  %s8 = inlined_call_operand.vmem [shape: f32[16,1], index: 8, kind: input, shape index: {}]
  %s9 = inlined_call_operand.<no memory space> [shape: f32[1,1], index: 9, kind: input, shape index: {}]
  %s10 = inlined_call_operand.hbm [shape: f32[8,128], index: 10, kind: output, shape index: {}]
  %s11 = sld [smem:[#allocation0]]
  $region50: #{tpu_custom_call.1} parent=0
    _
  %s13 = ssub.s32 1, %s11
  %s14 = scalar_select 0, %s13, %s11
  %v15 = vstv %s9
  %16 = vst [vmem:[#allocation3] sm:$0x1] %v15
  $region1: #{tpu_custom_call.1} parent=0
    #allocation4 [shape = 'u8[4096]{0}', space=vmem, size = 0x1000, scoped, tag = 'output window, operand 0, single buffered']
    #allocation5 [shape = 's32[1]{0}', space=sflag, size = 0x4, scoped, tag = 'scoped memory for tpu_custom_call.1']
    %17 = vsyncpa [#allocation5], 0
    // Predicated region
    $region2: #{tpu_custom_call.1} parent=1 // pred_check
      _
    $region3: #{tpu_custom_call.1} parent=1 // pred_check_branch
      %19 = sbr.rel (0) target = $region5
    $region4: #{tpu_custom_call.1} parent=1 // pred_region
      _
    $region5: #{tpu_custom_call.1} parent=1 // pred_fallthru
      _
    // Predicated region
    $region6: #{tpu_custom_call.1} parent=1 // pred_check
      _
    $region7: #{tpu_custom_call.1} parent=1 // pred_check_branch
      %21 = sbr.rel (0) target = $region9
    $region8: #{tpu_custom_call.1} parent=1 // pred_region
      _
    $region9: #{tpu_custom_call.1} parent=1 // pred_fallthru
      _
    // Predicated region
    $region10: #{tpu_custom_call.1} parent=1 // pred_check
      _
    $region11: #{tpu_custom_call.1} parent=1 // pred_check_branch
      %23 = sbr.rel (0) target = $region13
    $region12: #{tpu_custom_call.1} parent=1 // pred_region
      _
    $region13: #{tpu_custom_call.1} parent=1 // pred_fallthru
      _
    // Predicated region
    $region14: #{tpu_custom_call.1} parent=1 // pred_check
      _
    $region15: #{tpu_custom_call.1} parent=1 // pred_check_branch
      %25 = sbr.rel (0) target = $region17
    $region16: #{tpu_custom_call.1} parent=1 // pred_region
      _
    $region17: #{tpu_custom_call.1} parent=1 // pred_fallthru
      _
    // Predicated region
    $region18: #{tpu_custom_call.1} parent=1 // pred_check
      _
    $region19: #{tpu_custom_call.1} parent=1 // pred_check_branch
      %27 = sbr.rel (0) target = $region21
    $region20: #{tpu_custom_call.1} parent=1 // pred_region
      _
    $region21: #{tpu_custom_call.1} parent=1 // pred_fallthru
      _
    // Predicated region
    $region22: #{tpu_custom_call.1} parent=1 // pred_check
      _
    $region23: #{tpu_custom_call.1} parent=1 // pred_check_branch
      %29 = sbr.rel (0) target = $region25
    $region24: #{tpu_custom_call.1} parent=1 // pred_region
      _
    $region25: #{tpu_custom_call.1} parent=1 // pred_fallthru
      _
    // Predicated region
    $region26: #{tpu_custom_call.1} parent=1 // pred_check
      _
    $region27: #{tpu_custom_call.1} parent=1 // pred_check_branch
      %31 = sbr.rel (0) target = $region29
    $region28: #{tpu_custom_call.1} parent=1 // pred_region
      _
    $region29: #{tpu_custom_call.1} parent=1 // pred_fallthru
      _
    // Predicated region
    $region30: #{tpu_custom_call.1} parent=1 // pred_check
      _
    $region31: #{tpu_custom_call.1} parent=1 // pred_check_branch
      %33 = sbr.rel (0) target = $region33
    $region32: #{tpu_custom_call.1} parent=1 // pred_region
      _
    $region33: #{tpu_custom_call.1} parent=1 // pred_fallthru
      _
    // Predicated region
    $region34: #{tpu_custom_call.1} parent=1 // pred_check
      _
    $region35: #{tpu_custom_call.1} parent=1 // pred_check_branch
      %35 = sbr.rel (0) target = $region37
    $region36: #{tpu_custom_call.1} parent=1 // pred_region
      _
    $region37: #{tpu_custom_call.1} parent=1 // pred_fallthru
      _
    // Predicated region
    $region38: #{tpu_custom_call.1} parent=1 // pred_check
      _
    $region39: #{tpu_custom_call.1} parent=1 // pred_check_branch
      %37 = sbr.rel (0) target = $region41
    $region40: #{tpu_custom_call.1} parent=1 // pred_region
      _
    $region41: #{tpu_custom_call.1} parent=1 // pred_fallthru
      _
    %v39 = vld [vmem:[%s2] sm:$0xf]
    %v40 = vld [vmem:[%s2 + $0x4] sm:$0xf]
    %v41 = vld [vmem:[%s2 + $0x8] sm:$0xf]
    %v42 = vld [vmem:[%s2 + $0xc] sm:$0xf]
    %v43 = vld [vmem:[%s4] sm:$0xf]
    %v44 = vld [vmem:[%s4 + $0x4] sm:$0xf]
    %v45 = vld [vmem:[%s4 + $0x8] sm:$0xf]
    %v46 = vld [vmem:[%s4 + $0xc] sm:$0xf]
    %v47 = vld [vmem:[%s4 + $0x10] sm:$0xf]
    %v48 = vld [vmem:[%s4 + $0x14] sm:$0xf]
    %v49 = vld [vmem:[%s3] sm:$0xff]
    %v50 = vld [vmem:[%s3 + $0x8] sm:$0xff]
    %v51 = vld [vmem:[%s3 + $0x10] sm:$0xff]
    %v52 = vld [vmem:[%s3 + $0x18] sm:$0xff]
    %v53 = vld [vmem:[%s5] sm:$0xff]
    %v54 = vld [vmem:[%s5 + $0x8] sm:$0xff]
    %v55 = vld [vmem:[%s5 + $0x10] sm:$0xff]
    %v56 = vld [vmem:[%s5 + $0x18] sm:$0xff]
    %v57 = vld [vmem:[%s5 + $0x20] sm:$0xff]
    %v58 = vld [vmem:[%s5 + $0x28] sm:$0xff]
    %v59 = vld [vmem:[%s1] sm:$0xff]
    %v60 = vld [vmem:[%s1 + $0x8] sm:$0xff]
    %v61 = vld [vmem:[%s1 + $0x10] sm:$0xff]
    %v62 = vld [vmem:[%s1 + $0x18] sm:$0xff]
    %v63 = vld [vmem:[%s1 + $0x20] sm:$0xff]
    %v64 = vld [vmem:[%s1 + $0x28] sm:$0xff]
    %v65 = vld [vmem:[%s1 + $0x30] sm:$0xff]
    %v66 = vld [vmem:[%s1 + $0x38] sm:$0xff]
    %v67 = vld [vmem:[%s1 + $0x40] sm:$0xff]
    %v68 = vld [vmem:[%s1 + $0x48] sm:$0xff]
    %v69 = vld [vmem:[%s1 + $0x50] sm:$0xff]
    %v70 = vld [vmem:[%s1 + $0x58] sm:$0xff]
    %v71 = vld [vmem:[%s1 + $0x60] sm:$0xff]
    %v72 = vld [vmem:[%s1 + $0x68] sm:$0xff]
    %v73 = vld [vmem:[%s1 + $0x70] sm:$0xff]
    %v74 = vld [vmem:[%s1 + $0x78] sm:$0xff]
    %v75 = vld [vmem:[%s1 + $0x80] sm:$0xff]
    %v76 = vld [vmem:[%s1 + $0x88] sm:$0xff]
    %v77 = vld [vmem:[%s1 + $0x90] sm:$0xff]
    %v78 = vld [vmem:[%s1 + $0x98] sm:$0xff]
    %80 = vset.pattern.permute.xlu0 0
    %81 = vperm.xlu0 %80, %v49
    %v82 = vpop.permute.xlu0 %81
    %85 = vset.pattern.permute.xlu0 0
    %86 = vperm.xlu0 %85, %v50
    %v87 = vpop.permute.xlu0 %86
    %90 = vset.pattern.permute.xlu0 0
    %91 = vperm.xlu0 %90, %v51
    %v92 = vpop.permute.xlu0 %91
    %95 = vset.pattern.permute.xlu0 0
    %96 = vperm.xlu0 %95, %v52
    %v97 = vpop.permute.xlu0 %96
    %v103 = vunpack.c.l.b16 %v39
    %v104 = vunpack.c.l.b16 %v40
    %v105 = vunpack.c.l.b16 %v41
    %v106 = vunpack.c.l.b16 %v42
    %v107 = vpack.c.b16 %v104, %v103
    %v108 = vpack.c.b16 %v106, %v105
    %v129 = vunpack.c.l.b16 %v59
    %v130 = vunpack.c.h.b16 %v59
    %v131 = vunpack.c.l.b16 %v60
    %v132 = vunpack.c.h.b16 %v60
    %v133 = vunpack.c.l.b16 %v61
    %v134 = vunpack.c.h.b16 %v61
    %v135 = vunpack.c.l.b16 %v62
    %v136 = vunpack.c.h.b16 %v62
    %v137 = vunpack.c.l.b16 %v63
    %v138 = vunpack.c.h.b16 %v63
    %v139 = vunpack.c.l.b16 %v64
    %v140 = vunpack.c.h.b16 %v64
    %v141 = vunpack.c.l.b16 %v65
    %v142 = vunpack.c.h.b16 %v65
    %v143 = vunpack.c.l.b16 %v66
    %v144 = vunpack.c.h.b16 %v66
    %v145 = vunpack.c.l.b16 %v67
    %v146 = vunpack.c.h.b16 %v67
    %v147 = vunpack.c.l.b16 %v68
    %v148 = vunpack.c.h.b16 %v68
    %v149 = vunpack.c.l.b16 %v69
    %v150 = vunpack.c.h.b16 %v69
    %v151 = vunpack.c.l.b16 %v70
    %v152 = vunpack.c.h.b16 %v70
    %v153 = vunpack.c.l.b16 %v71
    %v154 = vunpack.c.h.b16 %v71
    %v155 = vunpack.c.l.b16 %v72
    %v156 = vunpack.c.h.b16 %v72
    %v157 = vunpack.c.l.b16 %v73
    %v158 = vunpack.c.h.b16 %v73
    %v159 = vunpack.c.l.b16 %v74
    %v160 = vunpack.c.h.b16 %v74
    %v161 = vunpack.c.l.b16 %v75
    %v162 = vunpack.c.h.b16 %v75
    %v163 = vunpack.c.l.b16 %v76
    %v164 = vunpack.c.h.b16 %v76
    %v165 = vunpack.c.l.b16 %v77
    %v166 = vunpack.c.h.b16 %v77
    %v167 = vunpack.c.l.b16 %v78
    %v168 = vunpack.c.h.b16 %v78
    %v169 = vpack.c.b16 %v137, %v129
    %v170 = vpack.c.b16 %v138, %v130
    %v171 = vpack.c.b16 %v139, %v131
    %v172 = vpack.c.b16 %v140, %v132
    %v173 = vpack.c.b16 %v141, %v133
    %v174 = vpack.c.b16 %v142, %v134
    %v175 = vpack.c.b16 %v143, %v135
    %v176 = vpack.c.b16 %v144, %v136
    %v177 = vpack.c.b16 %v153, %v145
    %v178 = vpack.c.b16 %v154, %v146
    %v179 = vpack.c.b16 %v155, %v147
    %v180 = vpack.c.b16 %v156, %v148
    %v181 = vpack.c.b16 %v157, %v149
    %v182 = vpack.c.b16 %v158, %v150
    %v183 = vpack.c.b16 %v159, %v151
    %v184 = vpack.c.b16 %v160, %v152
    %v185 = vpack.c.b16 %v161, %v161
    %v186 = vpack.c.b16 %v162, %v162
    %v187 = vpack.c.b16 %v163, %v163
    %v188 = vpack.c.b16 %v164, %v164
    %v189 = vpack.c.b16 %v165, %v165
    %v190 = vpack.c.b16 %v166, %v166
    %v191 = vpack.c.b16 %v167, %v167
    %v192 = vpack.c.b16 %v168, %v168
    %vm209 = vcmask 326656
    %v211 = vsel %vm209, %v107, 0
    %v214 = vsel %vm209, %v108, 0
    %vm216 = vcmask 1043456
    %v218 = vsel %vm216, %v185, 0
    %v221 = vsel %vm216, %v186, 0
    %v224 = vsel %vm216, %v187, 0
    %v227 = vsel %vm216, %v188, 0
    %v230 = vsel %vm216, %v189, 0
    %v233 = vsel %vm216, %v190, 0
    %v236 = vsel %vm216, %v191, 0
    %v239 = vsel %vm216, %v192, 0
    %241 = vmatprep.subr.bf16.mxu0 0
    %242 = vmatpush1.bf16.msra.mxu0 0
    %243 = vmatprep.subr.bf16.mxu0 0
    %244 = vmatpush1.bf16.msra.mxu0 0
    %245 = vmatprep.subr.bf16.mxu0 0
    %246 = vmatpush1.bf16.msra.mxu0 0
    %247 = vmatprep.subr.bf16.mxu0 0
    %248 = vmatpush1.bf16.msra.mxu0 0
    %249 = vmatprep.subr.bf16.mxu0 0
    %250 = vmatpush1.bf16.msra.mxu0 0
    %251 = vmatprep.subr.bf16.mxu0 %v221
    %252 = vmatpush1.bf16.msra.mxu0 %v218
    %253 = vmatprep.subr.bf16.mxu0 %v178
    %254 = vmatpush1.bf16.msra.mxu0 %v177
    %255 = vmatprep.subr.bf16.mxu0 %v170
    %256 = vmatpush1.bf16.msra.mxu0 %v169
    %257 = vmatprep.subr.bf16.mxu0 0
    %258 = vmatpush2.bf16.msra.mxu0 0
    %259 = vmatprep.subr.bf16.mxu0 0
    %260 = vmatpush2.bf16.msra.mxu0 0
    %261 = vmatprep.subr.bf16.mxu0 0
    %262 = vmatpush2.bf16.msra.mxu0 0
    %263 = vmatprep.subr.bf16.mxu0 0
    %264 = vmatpush2.bf16.msra.mxu0 0
    %265 = vmatprep.subr.bf16.mxu0 0
    %266 = vmatpush2.bf16.msra.mxu0 0
    %267 = vmatprep.subr.bf16.mxu0 0
    %268 = vmatpush2.bf16.msra.mxu0 0
    %269 = vmatprep.subr.bf16.mxu0 0
    %270 = vmatpush2.bf16.msra.mxu0 0
    %271 = vmatprep.subr.bf16.mxu0 0
    %272 = vmatpush2.bf16.msra.mxu0 0
    %273 = vmatprep.mubr.bf16.mxu0 0
    %274 = vmatmul.mubr.bf16.gmra.mxu0 %v211
    %v275 = vpop.f32.mrf.mxu0
    %v276 = vadd.f32 %v82, %v275
    %v277 = vpop.f32.mrf.mxu0
    %v278 = vadd.f32 %v82, %v277
    %v279 = vpop.f32.mrf.mxu0
    %v280 = vadd.f32 %v87, %v279
    %v281 = vpop.f32.mrf.mxu0
    %v282 = vadd.f32 %v87, %v281
    %283 = vmatprep.mubr.bf16.mxu0 0
    %284 = vmatmul.mubr.bf16.gmra.mxu0 %v214
    %v285 = vpop.f32.mrf.mxu0
    %v286 = vadd.f32 %v92, %v285
    %v287 = vpop.f32.mrf.mxu0
    %v288 = vadd.f32 %v92, %v287
    %v289 = vpop.f32.mrf.mxu0
    %v290 = vadd.f32 %v97, %v289
    %v291 = vpop.f32.mrf.mxu0
    %v292 = vadd.f32 %v97, %v291
    %293 = vdwg.mxu0
    %294 = vmatprep.subr.bf16.mxu0 0
    %295 = vmatpush1.bf16.msra.mxu0 0
    %296 = vmatprep.subr.bf16.mxu0 0
    %297 = vmatpush1.bf16.msra.mxu0 0
    %298 = vmatprep.subr.bf16.mxu0 0
    %299 = vmatpush1.bf16.msra.mxu0 0
    %300 = vmatprep.subr.bf16.mxu0 0
    %301 = vmatpush1.bf16.msra.mxu0 0
    %302 = vmatprep.subr.bf16.mxu0 0
    %303 = vmatpush1.bf16.msra.mxu0 0
    %304 = vmatprep.subr.bf16.mxu0 %v227
    %305 = vmatpush1.bf16.msra.mxu0 %v224
    %306 = vmatprep.subr.bf16.mxu0 %v180
    %307 = vmatpush1.bf16.msra.mxu0 %v179
    %308 = vmatprep.subr.bf16.mxu0 %v172
    %309 = vmatpush1.bf16.msra.mxu0 %v171
    %310 = vmatprep.subr.bf16.mxu0 0
    %311 = vmatpush2.bf16.msra.mxu0 0
    %312 = vmatprep.subr.bf16.mxu0 0
    %313 = vmatpush2.bf16.msra.mxu0 0
    %314 = vmatprep.subr.bf16.mxu0 0
    %315 = vmatpush2.bf16.msra.mxu0 0
    %316 = vmatprep.subr.bf16.mxu0 0
    %317 = vmatpush2.bf16.msra.mxu0 0
    %318 = vmatprep.subr.bf16.mxu0 0
    %319 = vmatpush2.bf16.msra.mxu0 0
    %320 = vmatprep.subr.bf16.mxu0 0
    %321 = vmatpush2.bf16.msra.mxu0 0
    %322 = vmatprep.subr.bf16.mxu0 0
    %323 = vmatpush2.bf16.msra.mxu0 0
    %324 = vmatprep.subr.bf16.mxu0 0
    %325 = vmatpush2.bf16.msra.mxu0 0
    %326 = vmatprep.mubr.bf16.mxu0 0
    %327 = vmatmul.mubr.bf16.gmra.mxu0 %v211
    %v328 = vpop.f32.mrf.mxu0
    %v329 = vadd.f32 %v82, %v328
    %v330 = vpop.f32.mrf.mxu0
    %v331 = vadd.f32 %v82, %v330
    %v332 = vpop.f32.mrf.mxu0
    %v333 = vadd.f32 %v87, %v332
    %v334 = vpop.f32.mrf.mxu0
    %v335 = vadd.f32 %v87, %v334
    %336 = vmatprep.mubr.bf16.mxu0 0
    %337 = vmatmul.mubr.bf16.gmra.mxu0 %v214
    %v338 = vpop.f32.mrf.mxu0
    %v339 = vadd.f32 %v92, %v338
    %v340 = vpop.f32.mrf.mxu0
    %v341 = vadd.f32 %v92, %v340
    %v342 = vpop.f32.mrf.mxu0
    %v343 = vadd.f32 %v97, %v342
    %v344 = vpop.f32.mrf.mxu0
    %v345 = vadd.f32 %v97, %v344
    %346 = vdwg.mxu0
    %347 = vmatprep.subr.bf16.mxu0 0
    %348 = vmatpush1.bf16.msra.mxu0 0
    %349 = vmatprep.subr.bf16.mxu0 0
    %350 = vmatpush1.bf16.msra.mxu0 0
    %351 = vmatprep.subr.bf16.mxu0 0
    %352 = vmatpush1.bf16.msra.mxu0 0
    %353 = vmatprep.subr.bf16.mxu0 0
    %354 = vmatpush1.bf16.msra.mxu0 0
    %355 = vmatprep.subr.bf16.mxu0 0
    %356 = vmatpush1.bf16.msra.mxu0 0
    %357 = vmatprep.subr.bf16.mxu0 %v233
    %358 = vmatpush1.bf16.msra.mxu0 %v230
    %359 = vmatprep.subr.bf16.mxu0 %v182
    %360 = vmatpush1.bf16.msra.mxu0 %v181
    %361 = vmatprep.subr.bf16.mxu0 %v174
    %362 = vmatpush1.bf16.msra.mxu0 %v173
    %363 = vmatprep.subr.bf16.mxu0 0
    %364 = vmatpush2.bf16.msra.mxu0 0
    %365 = vmatprep.subr.bf16.mxu0 0
    %366 = vmatpush2.bf16.msra.mxu0 0
    %367 = vmatprep.subr.bf16.mxu0 0
    %368 = vmatpush2.bf16.msra.mxu0 0
    %369 = vmatprep.subr.bf16.mxu0 0
    %370 = vmatpush2.bf16.msra.mxu0 0
    %371 = vmatprep.subr.bf16.mxu0 0
    %372 = vmatpush2.bf16.msra.mxu0 0
    %373 = vmatprep.subr.bf16.mxu0 0
    %374 = vmatpush2.bf16.msra.mxu0 0
    %375 = vmatprep.subr.bf16.mxu0 0
    %376 = vmatpush2.bf16.msra.mxu0 0
    %377 = vmatprep.subr.bf16.mxu0 0
    %378 = vmatpush2.bf16.msra.mxu0 0
    %379 = vmatprep.mubr.bf16.mxu0 0
    %380 = vmatmul.mubr.bf16.gmra.mxu0 %v211
    %v381 = vpop.f32.mrf.mxu0
    %v382 = vadd.f32 %v82, %v381
    %v383 = vpop.f32.mrf.mxu0
    %v384 = vadd.f32 %v82, %v383
    %v385 = vpop.f32.mrf.mxu0
    %v386 = vadd.f32 %v87, %v385
    %v387 = vpop.f32.mrf.mxu0
    %v388 = vadd.f32 %v87, %v387
    %389 = vmatprep.mubr.bf16.mxu0 0
    %390 = vmatmul.mubr.bf16.gmra.mxu0 %v214
    %v391 = vpop.f32.mrf.mxu0
    %v392 = vadd.f32 %v92, %v391
    %v393 = vpop.f32.mrf.mxu0
    %v394 = vadd.f32 %v92, %v393
    %v395 = vpop.f32.mrf.mxu0
    %v396 = vadd.f32 %v97, %v395
    %v397 = vpop.f32.mrf.mxu0
    %v398 = vadd.f32 %v97, %v397
    %399 = vdwg.mxu0
    %400 = vmatprep.subr.bf16.mxu0 0
    %401 = vmatpush1.bf16.msra.mxu0 0
    %402 = vmatprep.subr.bf16.mxu0 0
    %403 = vmatpush1.bf16.msra.mxu0 0
    %404 = vmatprep.subr.bf16.mxu0 0
    %405 = vmatpush1.bf16.msra.mxu0 0
    %406 = vmatprep.subr.bf16.mxu0 0
    %407 = vmatpush1.bf16.msra.mxu0 0
    %408 = vmatprep.subr.bf16.mxu0 0
    %409 = vmatpush1.bf16.msra.mxu0 0
    %410 = vmatprep.subr.bf16.mxu0 %v239
    %411 = vmatpush1.bf16.msra.mxu0 %v236
    %412 = vmatprep.subr.bf16.mxu0 %v184
    %413 = vmatpush1.bf16.msra.mxu0 %v183
    %414 = vmatprep.subr.bf16.mxu0 %v176
    %415 = vmatpush1.bf16.msra.mxu0 %v175
    %416 = vmatprep.subr.bf16.mxu0 0
    %417 = vmatpush2.bf16.msra.mxu0 0
    %418 = vmatprep.subr.bf16.mxu0 0
    %419 = vmatpush2.bf16.msra.mxu0 0
    %420 = vmatprep.subr.bf16.mxu0 0
    %421 = vmatpush2.bf16.msra.mxu0 0
    %422 = vmatprep.subr.bf16.mxu0 0
    %423 = vmatpush2.bf16.msra.mxu0 0
    %424 = vmatprep.subr.bf16.mxu0 0
    %425 = vmatpush2.bf16.msra.mxu0 0
    %426 = vmatprep.subr.bf16.mxu0 0
    %427 = vmatpush2.bf16.msra.mxu0 0
    %428 = vmatprep.subr.bf16.mxu0 0
    %429 = vmatpush2.bf16.msra.mxu0 0
    %430 = vmatprep.subr.bf16.mxu0 0
    %431 = vmatpush2.bf16.msra.mxu0 0
    %432 = vmatprep.mubr.bf16.mxu0 0
    %433 = vmatmul.mubr.bf16.gmra.mxu0 %v211
    %v434 = vpop.f32.mrf.mxu0
    %v435 = vadd.f32 %v82, %v434
    %v436 = vpop.f32.mrf.mxu0
    %v437 = vadd.f32 %v82, %v436
    %v438 = vpop.f32.mrf.mxu0
    %v439 = vadd.f32 %v87, %v438
    %v440 = vpop.f32.mrf.mxu0
    %v441 = vadd.f32 %v87, %v440
    %442 = vmatprep.mubr.bf16.mxu0 0
    %443 = vmatmul.mubr.bf16.gmra.mxu0 %v214
    %v444 = vpop.f32.mrf.mxu0
    %v445 = vadd.f32 %v92, %v444
    %v446 = vpop.f32.mrf.mxu0
    %v447 = vadd.f32 %v92, %v446
    %v448 = vpop.f32.mrf.mxu0
    %v449 = vadd.f32 %v97, %v448
    %v450 = vpop.f32.mrf.mxu0
    %v451 = vadd.f32 %v97, %v450
    %452 = vdwg.mxu0
    %v453 = vtanh.pop %v276
    %v454 = vtanh.pop %v278
    %v455 = vtanh.pop %v329
    %v456 = vtanh.pop %v331
    %v457 = vtanh.pop %v382
    %v458 = vtanh.pop %v384
    %v459 = vtanh.pop %v435
    %v460 = vtanh.pop %v437
    %v461 = vtanh.pop %v280
    %v462 = vtanh.pop %v282
    %v463 = vtanh.pop %v333
    %v464 = vtanh.pop %v335
    %v465 = vtanh.pop %v386
    %v466 = vtanh.pop %v388
    %v467 = vtanh.pop %v439
    %v468 = vtanh.pop %v441
    %v469 = vtanh.pop %v286
    %v470 = vtanh.pop %v288
    %v471 = vtanh.pop %v339
    %v472 = vtanh.pop %v341
    %v473 = vtanh.pop %v392
    %v474 = vtanh.pop %v394
    %v475 = vtanh.pop %v445
    %v476 = vtanh.pop %v447
    %v477 = vtanh.pop %v290
    %v478 = vtanh.pop %v292
    %v479 = vtanh.pop %v343
    %v480 = vtanh.pop %v345
    %v481 = vtanh.pop %v396
    %v482 = vtanh.pop %v398
    %v483 = vtanh.pop %v449
    %v484 = vtanh.pop %v451
    %v485 = vpack.c.bf16 %v461, %v453
    %v486 = vpack.c.bf16 %v462, %v454
    %v487 = vpack.c.bf16 %v463, %v455
    %v488 = vpack.c.bf16 %v464, %v456
    %v489 = vpack.c.bf16 %v465, %v457
    %v490 = vpack.c.bf16 %v466, %v458
    %v491 = vpack.c.bf16 %v467, %v459
    %v492 = vpack.c.bf16 %v468, %v460
    %v493 = vpack.c.bf16 %v477, %v469
    %v494 = vpack.c.bf16 %v478, %v470
    %v495 = vpack.c.bf16 %v479, %v471
    %v496 = vpack.c.bf16 %v480, %v472
    %v497 = vpack.c.bf16 %v481, %v473
    %v498 = vpack.c.bf16 %v482, %v474
    %v499 = vpack.c.bf16 %v483, %v475
    %v500 = vpack.c.bf16 %v484, %v476
    %502 = vset.pattern.permute.xlu0 0
    %503 = vperm.xlu0 %502, %v53
    %v504 = vpop.permute.xlu0 %503
    %507 = vset.pattern.permute.xlu0 0
    %508 = vperm.xlu0 %507, %v54
    %v509 = vpop.permute.xlu0 %508
    %512 = vset.pattern.permute.xlu0 0
    %513 = vperm.xlu0 %512, %v55
    %v514 = vpop.permute.xlu0 %513
    %517 = vset.pattern.permute.xlu0 0
    %518 = vperm.xlu0 %517, %v56
    %v519 = vpop.permute.xlu0 %518
    %522 = vset.pattern.permute.xlu0 0
    %523 = vperm.xlu0 %522, %v57
    %v524 = vpop.permute.xlu0 %523
    %527 = vset.pattern.permute.xlu0 0
    %528 = vperm.xlu0 %527, %v58
    %v529 = vpop.permute.xlu0 %528
    %v537 = vunpack.c.l.b16 %v43
    %v538 = vunpack.c.l.b16 %v44
    %v539 = vunpack.c.l.b16 %v45
    %v540 = vunpack.c.l.b16 %v46
    %v541 = vunpack.c.l.b16 %v47
    %v542 = vunpack.c.l.b16 %v48
    %v543 = vpack.c.b16 %v538, %v537
    %v544 = vpack.c.b16 %v540, %v539
    %v545 = vpack.c.b16 %v542, %v541
    %vm546 = vcmask 261120
    %v548 = vsel %vm546, %v543, 0
    %v551 = vsel %vm546, %v544, 0
    %v554 = vsel %vm546, %v545, 0
    %556 = vmatprep.subr.bf16.mxu0 0
    %557 = vmatpush1.bf16.msra.mxu0 0
    %558 = vmatprep.subr.bf16.mxu0 0
    %559 = vmatpush1.bf16.msra.mxu0 0
    %560 = vmatprep.subr.bf16.mxu0 0
    %561 = vmatpush1.bf16.msra.mxu0 0
    %562 = vmatprep.subr.bf16.mxu0 0
    %563 = vmatpush1.bf16.msra.mxu0 0
    %564 = vmatprep.subr.bf16.mxu0 0
    %565 = vmatpush1.bf16.msra.mxu0 0
    %566 = vmatprep.subr.bf16.mxu0 0
    %567 = vmatpush1.bf16.msra.mxu0 0
    %568 = vmatprep.subr.bf16.mxu0 %v494
    %569 = vmatpush1.bf16.msra.mxu0 %v493
    %570 = vmatprep.subr.bf16.mxu0 %v486
    %571 = vmatpush1.bf16.msra.mxu0 %v485
    %572 = vmatprep.subr.bf16.mxu0 0
    %573 = vmatpush2.bf16.msra.mxu0 0
    %574 = vmatprep.subr.bf16.mxu0 0
    %575 = vmatpush2.bf16.msra.mxu0 0
    %576 = vmatprep.subr.bf16.mxu0 0
    %577 = vmatpush2.bf16.msra.mxu0 0
    %578 = vmatprep.subr.bf16.mxu0 0
    %579 = vmatpush2.bf16.msra.mxu0 0
    %580 = vmatprep.subr.bf16.mxu0 0
    %581 = vmatpush2.bf16.msra.mxu0 0
    %582 = vmatprep.subr.bf16.mxu0 0
    %583 = vmatpush2.bf16.msra.mxu0 0
    %584 = vmatprep.subr.bf16.mxu0 0
    %585 = vmatpush2.bf16.msra.mxu0 0
    %586 = vmatprep.subr.bf16.mxu0 0
    %587 = vmatpush2.bf16.msra.mxu0 0
    %588 = vmatprep.mubr.bf16.mxu0 0
    %589 = vmatmul.mubr.bf16.gmra.mxu0 %v548
    %v590 = vpop.f32.mrf.mxu0
    %v591 = vadd.f32 %v504, %v590
    %v592 = vpop.f32.mrf.mxu0
    %v593 = vadd.f32 %v504, %v592
    %v594 = vpop.f32.mrf.mxu0
    %v595 = vadd.f32 %v509, %v594
    %v596 = vpop.f32.mrf.mxu0
    %v597 = vadd.f32 %v509, %v596
    %598 = vmatprep.mubr.bf16.mxu0 0
    %599 = vmatmul.mubr.bf16.gmra.mxu0 %v551
    %v600 = vpop.f32.mrf.mxu0
    %v601 = vadd.f32 %v514, %v600
    %v602 = vpop.f32.mrf.mxu0
    %v603 = vadd.f32 %v514, %v602
    %v604 = vpop.f32.mrf.mxu0
    %v605 = vadd.f32 %v519, %v604
    %v606 = vpop.f32.mrf.mxu0
    %v607 = vadd.f32 %v519, %v606
    %608 = vmatprep.mubr.bf16.mxu0 0
    %609 = vmatmul.mubr.bf16.gmra.mxu0 %v554
    %v610 = vpop.f32.mrf.mxu0
    %v611 = vadd.f32 %v524, %v610
    %v612 = vpop.f32.mrf.mxu0
    %v613 = vadd.f32 %v524, %v612
    %v614 = vpop.f32.mrf.mxu0
    %v615 = vadd.f32 %v529, %v614
    %v616 = vpop.f32.mrf.mxu0
    %v617 = vadd.f32 %v529, %v616
    %618 = vdwg.mxu0
    %619 = vmatprep.subr.bf16.mxu0 0
    %620 = vmatpush1.bf16.msra.mxu0 0
    %621 = vmatprep.subr.bf16.mxu0 0
    %622 = vmatpush1.bf16.msra.mxu0 0
    %623 = vmatprep.subr.bf16.mxu0 0
    %624 = vmatpush1.bf16.msra.mxu0 0
    %625 = vmatprep.subr.bf16.mxu0 0
    %626 = vmatpush1.bf16.msra.mxu0 0
    %627 = vmatprep.subr.bf16.mxu0 0
    %628 = vmatpush1.bf16.msra.mxu0 0
    %629 = vmatprep.subr.bf16.mxu0 0
    %630 = vmatpush1.bf16.msra.mxu0 0
    %631 = vmatprep.subr.bf16.mxu0 %v496
    %632 = vmatpush1.bf16.msra.mxu0 %v495
    %633 = vmatprep.subr.bf16.mxu0 %v488
    %634 = vmatpush1.bf16.msra.mxu0 %v487
    %635 = vmatprep.subr.bf16.mxu0 0
    %636 = vmatpush2.bf16.msra.mxu0 0
    %637 = vmatprep.subr.bf16.mxu0 0
    %638 = vmatpush2.bf16.msra.mxu0 0
    %639 = vmatprep.subr.bf16.mxu0 0
    %640 = vmatpush2.bf16.msra.mxu0 0
    %641 = vmatprep.subr.bf16.mxu0 0
    %642 = vmatpush2.bf16.msra.mxu0 0
    %643 = vmatprep.subr.bf16.mxu0 0
    %644 = vmatpush2.bf16.msra.mxu0 0
    %645 = vmatprep.subr.bf16.mxu0 0
    %646 = vmatpush2.bf16.msra.mxu0 0
    %647 = vmatprep.subr.bf16.mxu0 0
    %648 = vmatpush2.bf16.msra.mxu0 0
    %649 = vmatprep.subr.bf16.mxu0 0
    %650 = vmatpush2.bf16.msra.mxu0 0
    %651 = vmatprep.mubr.bf16.mxu0 0
    %652 = vmatmul.mubr.bf16.gmra.mxu0 %v548
    %v653 = vpop.f32.mrf.mxu0
    %v654 = vadd.f32 %v504, %v653
    %v655 = vpop.f32.mrf.mxu0
    %v656 = vadd.f32 %v504, %v655
    %v657 = vpop.f32.mrf.mxu0
    %v658 = vadd.f32 %v509, %v657
    %v659 = vpop.f32.mrf.mxu0
    %v660 = vadd.f32 %v509, %v659
    %661 = vmatprep.mubr.bf16.mxu0 0
    %662 = vmatmul.mubr.bf16.gmra.mxu0 %v551
    %v663 = vpop.f32.mrf.mxu0
    %v664 = vadd.f32 %v514, %v663
    %v665 = vpop.f32.mrf.mxu0
    %v666 = vadd.f32 %v514, %v665
    %v667 = vpop.f32.mrf.mxu0
    %v668 = vadd.f32 %v519, %v667
    %v669 = vpop.f32.mrf.mxu0
    %v670 = vadd.f32 %v519, %v669
    %671 = vmatprep.mubr.bf16.mxu0 0
    %672 = vmatmul.mubr.bf16.gmra.mxu0 %v554
    %v673 = vpop.f32.mrf.mxu0
    %v674 = vadd.f32 %v524, %v673
    %v675 = vpop.f32.mrf.mxu0
    %v676 = vadd.f32 %v524, %v675
    %v677 = vpop.f32.mrf.mxu0
    %v678 = vadd.f32 %v529, %v677
    %v679 = vpop.f32.mrf.mxu0
    %v680 = vadd.f32 %v529, %v679
    %681 = vdwg.mxu0
    %682 = vmatprep.subr.bf16.mxu0 0
    %683 = vmatpush1.bf16.msra.mxu0 0
    %684 = vmatprep.subr.bf16.mxu0 0
    %685 = vmatpush1.bf16.msra.mxu0 0
    %686 = vmatprep.subr.bf16.mxu0 0
    %687 = vmatpush1.bf16.msra.mxu0 0
    %688 = vmatprep.subr.bf16.mxu0 0
    %689 = vmatpush1.bf16.msra.mxu0 0
    %690 = vmatprep.subr.bf16.mxu0 0
    %691 = vmatpush1.bf16.msra.mxu0 0
    %692 = vmatprep.subr.bf16.mxu0 0
    %693 = vmatpush1.bf16.msra.mxu0 0
    %694 = vmatprep.subr.bf16.mxu0 %v498
    %695 = vmatpush1.bf16.msra.mxu0 %v497
    %696 = vmatprep.subr.bf16.mxu0 %v490
    %697 = vmatpush1.bf16.msra.mxu0 %v489
    %698 = vmatprep.subr.bf16.mxu0 0
    %699 = vmatpush2.bf16.msra.mxu0 0
    %700 = vmatprep.subr.bf16.mxu0 0
    %701 = vmatpush2.bf16.msra.mxu0 0
    %702 = vmatprep.subr.bf16.mxu0 0
    %703 = vmatpush2.bf16.msra.mxu0 0
    %704 = vmatprep.subr.bf16.mxu0 0
    %705 = vmatpush2.bf16.msra.mxu0 0
    %706 = vmatprep.subr.bf16.mxu0 0
    %707 = vmatpush2.bf16.msra.mxu0 0
    %708 = vmatprep.subr.bf16.mxu0 0
    %709 = vmatpush2.bf16.msra.mxu0 0
    %710 = vmatprep.subr.bf16.mxu0 0
    %711 = vmatpush2.bf16.msra.mxu0 0
    %712 = vmatprep.subr.bf16.mxu0 0
    %713 = vmatpush2.bf16.msra.mxu0 0
    %714 = vmatprep.mubr.bf16.mxu0 0
    %715 = vmatmul.mubr.bf16.gmra.mxu0 %v548
    %v716 = vpop.f32.mrf.mxu0
    %v717 = vadd.f32 %v504, %v716
    %v718 = vpop.f32.mrf.mxu0
    %v719 = vadd.f32 %v504, %v718
    %v720 = vpop.f32.mrf.mxu0
    %v721 = vadd.f32 %v509, %v720
    %v722 = vpop.f32.mrf.mxu0
    %v723 = vadd.f32 %v509, %v722
    %724 = vmatprep.mubr.bf16.mxu0 0
    %725 = vmatmul.mubr.bf16.gmra.mxu0 %v551
    %v726 = vpop.f32.mrf.mxu0
    %v727 = vadd.f32 %v514, %v726
    %v728 = vpop.f32.mrf.mxu0
    %v729 = vadd.f32 %v514, %v728
    %v730 = vpop.f32.mrf.mxu0
    %v731 = vadd.f32 %v519, %v730
    %v732 = vpop.f32.mrf.mxu0
    %v733 = vadd.f32 %v519, %v732
    %734 = vmatprep.mubr.bf16.mxu0 0
    %735 = vmatmul.mubr.bf16.gmra.mxu0 %v554
    %v736 = vpop.f32.mrf.mxu0
    %v737 = vadd.f32 %v524, %v736
    %v738 = vpop.f32.mrf.mxu0
    %v739 = vadd.f32 %v524, %v738
    %v740 = vpop.f32.mrf.mxu0
    %v741 = vadd.f32 %v529, %v740
    %v742 = vpop.f32.mrf.mxu0
    %v743 = vadd.f32 %v529, %v742
    %744 = vdwg.mxu0
    %745 = vmatprep.subr.bf16.mxu0 0
    %746 = vmatpush1.bf16.msra.mxu0 0
    %747 = vmatprep.subr.bf16.mxu0 0
    %748 = vmatpush1.bf16.msra.mxu0 0
    %749 = vmatprep.subr.bf16.mxu0 0
    %750 = vmatpush1.bf16.msra.mxu0 0
    %751 = vmatprep.subr.bf16.mxu0 0
    %752 = vmatpush1.bf16.msra.mxu0 0
    %753 = vmatprep.subr.bf16.mxu0 0
    %754 = vmatpush1.bf16.msra.mxu0 0
    %755 = vmatprep.subr.bf16.mxu0 0
    %756 = vmatpush1.bf16.msra.mxu0 0
    %757 = vmatprep.subr.bf16.mxu0 %v500
    %758 = vmatpush1.bf16.msra.mxu0 %v499
    %759 = vmatprep.subr.bf16.mxu0 %v492
    %760 = vmatpush1.bf16.msra.mxu0 %v491
    %761 = vmatprep.subr.bf16.mxu0 0
    %762 = vmatpush2.bf16.msra.mxu0 0
    %763 = vmatprep.subr.bf16.mxu0 0
    %764 = vmatpush2.bf16.msra.mxu0 0
    %765 = vmatprep.subr.bf16.mxu0 0
    %766 = vmatpush2.bf16.msra.mxu0 0
    %767 = vmatprep.subr.bf16.mxu0 0
    %768 = vmatpush2.bf16.msra.mxu0 0
    %769 = vmatprep.subr.bf16.mxu0 0
    %770 = vmatpush2.bf16.msra.mxu0 0
    %771 = vmatprep.subr.bf16.mxu0 0
    %772 = vmatpush2.bf16.msra.mxu0 0
    %773 = vmatprep.subr.bf16.mxu0 0
    %774 = vmatpush2.bf16.msra.mxu0 0
    %775 = vmatprep.subr.bf16.mxu0 0
    %776 = vmatpush2.bf16.msra.mxu0 0
    %777 = vmatprep.mubr.bf16.mxu0 0
    %778 = vmatmul.mubr.bf16.gmra.mxu0 %v548
    %v779 = vpop.f32.mrf.mxu0
    %v780 = vadd.f32 %v504, %v779
    %v781 = vpop.f32.mrf.mxu0
    %v782 = vadd.f32 %v504, %v781
    %v783 = vpop.f32.mrf.mxu0
    %v784 = vadd.f32 %v509, %v783
    %v785 = vpop.f32.mrf.mxu0
    %v786 = vadd.f32 %v509, %v785
    %787 = vmatprep.mubr.bf16.mxu0 0
    %788 = vmatmul.mubr.bf16.gmra.mxu0 %v551
    %v789 = vpop.f32.mrf.mxu0
    %v790 = vadd.f32 %v514, %v789
    %v791 = vpop.f32.mrf.mxu0
    %v792 = vadd.f32 %v514, %v791
    %v793 = vpop.f32.mrf.mxu0
    %v794 = vadd.f32 %v519, %v793
    %v795 = vpop.f32.mrf.mxu0
    %v796 = vadd.f32 %v519, %v795
    %797 = vmatprep.mubr.bf16.mxu0 0
    %798 = vmatmul.mubr.bf16.gmra.mxu0 %v554
    %v799 = vpop.f32.mrf.mxu0
    %v800 = vadd.f32 %v524, %v799
    %v801 = vpop.f32.mrf.mxu0
    %v802 = vadd.f32 %v524, %v801
    %v803 = vpop.f32.mrf.mxu0
    %v804 = vadd.f32 %v529, %v803
    %v805 = vpop.f32.mrf.mxu0
    %v806 = vadd.f32 %v529, %v805
    %807 = vdwg.mxu0
    %808 = vst [vmem:[#allocation2] sm:$0xff] %v591
    %809 = vst [vmem:[#allocation2 + $0x8] sm:$0xff] %v593
    %810 = vst [vmem:[#allocation2 + $0x10] sm:$0xff] %v654
    %811 = vst [vmem:[#allocation2 + $0x18] sm:$0xff] %v656
    %812 = vst [vmem:[#allocation2 + $0x20] sm:$0xff] %v717
    %813 = vst [vmem:[#allocation2 + $0x28] sm:$0xff] %v719
    %814 = vst [vmem:[#allocation2 + $0x30] sm:$0xff] %v780
    %815 = vst [vmem:[#allocation2 + $0x38] sm:$0xff] %v782
    %816 = vst [vmem:[#allocation2 + $0x40] sm:$0xff] %v595
    %817 = vst [vmem:[#allocation2 + $0x48] sm:$0xff] %v597
    %818 = vst [vmem:[#allocation2 + $0x50] sm:$0xff] %v658
    %819 = vst [vmem:[#allocation2 + $0x58] sm:$0xff] %v660
    %820 = vst [vmem:[#allocation2 + $0x60] sm:$0xff] %v721
    %821 = vst [vmem:[#allocation2 + $0x68] sm:$0xff] %v723
    %822 = vst [vmem:[#allocation2 + $0x70] sm:$0xff] %v784
    %823 = vst [vmem:[#allocation2 + $0x78] sm:$0xff] %v786
    %824 = vst [vmem:[#allocation2 + $0x80] sm:$0xff] %v601
    %825 = vst [vmem:[#allocation2 + $0x88] sm:$0xff] %v603
    %826 = vst [vmem:[#allocation2 + $0x90] sm:$0xff] %v664
    %827 = vst [vmem:[#allocation2 + $0x98] sm:$0xff] %v666
    %828 = vst [vmem:[#allocation2 + $0xa0] sm:$0xff] %v727
    %829 = vst [vmem:[#allocation2 + $0xa8] sm:$0xff] %v729
    %830 = vst [vmem:[#allocation2 + $0xb0] sm:$0xff] %v790
    %831 = vst [vmem:[#allocation2 + $0xb8] sm:$0xff] %v792
    %832 = vst [vmem:[#allocation2 + $0xc0] sm:$0xff] %v605
    %833 = vst [vmem:[#allocation2 + $0xc8] sm:$0xff] %v607
    %834 = vst [vmem:[#allocation2 + $0xd0] sm:$0xff] %v668
    %835 = vst [vmem:[#allocation2 + $0xd8] sm:$0xff] %v670
    %836 = vst [vmem:[#allocation2 + $0xe0] sm:$0xff] %v731
    %837 = vst [vmem:[#allocation2 + $0xe8] sm:$0xff] %v733
    %838 = vst [vmem:[#allocation2 + $0xf0] sm:$0xff] %v794
    %839 = vst [vmem:[#allocation2 + $0xf8] sm:$0xff] %v796
    %840 = vst [vmem:[#allocation2 + $0x100] sm:$0xff] %v611
    %841 = vst [vmem:[#allocation2 + $0x108] sm:$0xff] %v613
    %842 = vst [vmem:[#allocation2 + $0x110] sm:$0xff] %v674
    %843 = vst [vmem:[#allocation2 + $0x118] sm:$0xff] %v676
    %844 = vst [vmem:[#allocation2 + $0x120] sm:$0xff] %v737
    %845 = vst [vmem:[#allocation2 + $0x128] sm:$0xff] %v739
    %846 = vst [vmem:[#allocation2 + $0x130] sm:$0xff] %v800
    %847 = vst [vmem:[#allocation2 + $0x138] sm:$0xff] %v802
    %848 = vst [vmem:[#allocation2 + $0x140] sm:$0xff] %v615
    %849 = vst [vmem:[#allocation2 + $0x148] sm:$0xff] %v617
    %850 = vst [vmem:[#allocation2 + $0x150] sm:$0xff] %v678
    %851 = vst [vmem:[#allocation2 + $0x158] sm:$0xff] %v680
    %852 = vst [vmem:[#allocation2 + $0x160] sm:$0xff] %v741
    %853 = vst [vmem:[#allocation2 + $0x168] sm:$0xff] %v743
    %854 = vst [vmem:[#allocation2 + $0x170] sm:$0xff] %v804
    %855 = vst [vmem:[#allocation2 + $0x178] sm:$0xff] %v806
    %v856 = vld [vmem:[%s6] sm:$0xff]
    %v857 = vld [vmem:[%s6 + $0x8] sm:$0xff]
    %v858 = vld [vmem:[%s6 + $0x10] sm:$0xff]
    %v859 = vld [vmem:[%s6 + $0x18] sm:$0xff]
    %v860 = vld [vmem:[%s6 + $0x20] sm:$0xff]
    %v861 = vld [vmem:[%s6 + $0x28] sm:$0xff]
    %v862 = vld [vmem:[%s7] sm:$0xff]
    %v863 = vld [vmem:[%s7 + $0x8] sm:$0xff]
    %865 = vset.pattern.permute.xlu0 0
    %866 = vperm.xlu0 %865, %v862
    %v867 = vpop.permute.xlu0 %866
    %870 = vset.pattern.permute.xlu0 0
    %871 = vperm.xlu0 %870, %v863
    %v872 = vpop.permute.xlu0 %871
    %v874 = vld [vmem:[%s8] sm:$0xff]
    %v875 = vld [vmem:[%s8 + $0x8] sm:$0xff]
    %877 = vset.pattern.permute.xlu0 0
    %878 = vperm.xlu0 %877, %v874
    %v879 = vpop.permute.xlu0 %878
    %882 = vset.pattern.permute.xlu0 0
    %883 = vperm.xlu0 %882, %v875
    %v884 = vpop.permute.xlu0 %883
    %v886 = vld [vmem:[#allocation3] sm:$0x1]
    %888 = vset.pattern.permute.xlu0 0
    %889 = vperm.xlu0 %888, %v886
    %v890 = vpop.permute.xlu0 %889
    %v892 = vlaneseq
    %v893 = vshrl.u32 %v892, 7
    %v894 = vsub.s32 0, %v893
    %v895 = vrot.slane %v890, %v894
    %v896 = vld [vmem:[%s0] sm:$0x1]
    %v897 = vld [vmem:[#allocation2] sm:$0xff]
    %v898 = vld [vmem:[#allocation2 + $0x40] sm:$0xff]
    %v899 = vld [vmem:[#allocation2 + $0x80] sm:$0xff]
    %v900 = vld [vmem:[#allocation2 + $0xc0] sm:$0xff]
    %v901 = vld [vmem:[#allocation2 + $0x100] sm:$0xff]
    %v902 = vld [vmem:[#allocation2 + $0x140] sm:$0xff]
    %vm903 = vcmask 130048
    %v905 = vsel %vm903, %v856, 0
    %v908 = vsel %vm903, %v857, 0
    %v911 = vsel %vm903, %v858, 0
    %v914 = vsel %vm903, %v859, 0
    %v917 = vsel %vm903, %v860, 0
    %v920 = vsel %vm903, %v861, 0
    %922 = vmatprep.subr.mxu0 0.0
    %923 = vmatpush1.msra.mxu0 0.0
    %924 = vmatprep.subr.mxu0 0.0
    %925 = vmatpush1.msra.mxu0 0.0
    %926 = vmatprep.subr.mxu0 0.0
    %927 = vmatpush1.msra.mxu0 0.0
    %928 = vmatprep.subr.mxu0 0.0
    %929 = vmatpush1.msra.mxu0 0.0
    %930 = vmatprep.subr.mxu0 0.0
    %931 = vmatpush1.msra.mxu0 0.0
    %932 = vmatprep.subr.mxu0 0.0
    %933 = vmatpush1.msra.mxu0 0.0
    %934 = vmatprep.subr.mxu0 0.0
    %935 = vmatpush1.msra.mxu0 0.0
    %936 = vmatprep.subr.mxu0 0.0
    %937 = vmatpush1.msra.mxu0 0.0
    %938 = vmatprep.subr.mxu0 0.0
    %939 = vmatpush1.msra.mxu0 0.0
    %940 = vmatprep.subr.mxu0 0.0
    %941 = vmatpush1.msra.mxu0 0.0
    %942 = vmatprep.subr.mxu0 0.0
    %943 = vmatpush1.msra.mxu0 0.0
    %944 = vmatprep.subr.mxu0 0.0
    %945 = vmatpush1.msra.mxu0 0.0
    %946 = vmatprep.subr.mxu0 0.0
    %947 = vmatpush1.msra.mxu0 0.0
    %948 = vmatprep.subr.mxu0 0.0
    %949 = vmatpush1.msra.mxu0 0.0
    %950 = vmatprep.subr.mxu0 0.0
    %951 = vmatpush1.msra.mxu0 0.0
    %952 = vmatprep.subr.mxu0 0.0
    %953 = vmatpush1.msra.mxu0 0.0
    %954 = vmatprep.subr.mxu0 0.0
    %955 = vmatpush2.msra.mxu0 0.0
    %956 = vmatprep.subr.mxu0 0.0
    %957 = vmatpush2.msra.mxu0 0.0
    %958 = vmatprep.subr.mxu0 0.0
    %959 = vmatpush2.msra.mxu0 0.0
    %960 = vmatprep.subr.mxu0 0.0
    %961 = vmatpush2.msra.mxu0 0.0
    %962 = vmatprep.subr.mxu0 0.0
    %963 = vmatpush2.msra.mxu0 0.0
    %964 = vmatprep.subr.mxu0 0.0
    %965 = vmatpush2.msra.mxu0 0.0
    %966 = vmatprep.subr.mxu0 0.0
    %967 = vmatpush2.msra.mxu0 0.0
    %968 = vmatprep.subr.mxu0 0.0
    %969 = vmatpush2.msra.mxu0 0.0
    %970 = vmatprep.subr.mxu0 0.0
    %971 = vmatpush2.msra.mxu0 0.0
    %972 = vmatprep.subr.mxu0 0.0
    %973 = vmatpush2.msra.mxu0 0.0
    %974 = vmatprep.subr.mxu0 0.0
    %975 = vmatpush2.msra.mxu0 0.0
    %976 = vmatprep.subr.mxu0 0.0
    %977 = vmatpush2.msra.mxu0 0.0
    %978 = vmatprep.subr.mxu0 0.0
    %979 = vmatpush2.msra.mxu0 0.0
    %980 = vmatprep.subr.mxu0 0.0
    %981 = vmatpush2.msra.mxu0 0.0
    %982 = vmatprep.subr.mxu0 0.0
    %983 = vmatpush2.msra.mxu0 0.0
    %984 = vmatprep.subr.mxu0 0.0
    %985 = vmatpush2.msra.mxu0 0.0
    %986 = vmatprep.mubr.f32.mxu0 0.0
    %987 = vmatmul.mubr.f32.gmra.mxu0 %v905
    %v988 = vpop.f32.mrf.mxu0
    %v989 = vadd.f32 0.0, %v988
    %v990 = vpop.f32.mrf.mxu0
    %991 = vmatprep.mubr.f32.mxu0 0.0
    %992 = vmatmul.mubr.f32.gmra.mxu0 %v908
    %v993 = vpop.f32.mrf.mxu0
    %v994 = vadd.f32 0.0, %v993
    %v995 = vpop.f32.mrf.mxu0
    %996 = vmatprep.mubr.f32.mxu0 0.0
    %997 = vmatmul.mubr.f32.gmra.mxu0 %v911
    %v998 = vpop.f32.mrf.mxu0
    %v999 = vadd.f32 0.0, %v998
    %v1000 = vpop.f32.mrf.mxu0
    %1001 = vmatprep.mubr.f32.mxu0 0.0
    %1002 = vmatmul.mubr.f32.gmra.mxu0 %v914
    %v1003 = vpop.f32.mrf.mxu0
    %v1004 = vadd.f32 0.0, %v1003
    %v1005 = vpop.f32.mrf.mxu0
    %1006 = vmatprep.mubr.f32.mxu0 0.0
    %1007 = vmatmul.mubr.f32.gmra.mxu0 %v917
    %v1008 = vpop.f32.mrf.mxu0
    %v1009 = vadd.f32 0.0, %v1008
    %v1010 = vpop.f32.mrf.mxu0
    %1011 = vmatprep.mubr.f32.mxu0 0.0
    %1012 = vmatmul.mubr.f32.gmra.mxu0 %v920
    %v1013 = vpop.f32.mrf.mxu0
    %v1014 = vadd.f32 0.0, %v1013
    %v1015 = vpop.f32.mrf.mxu0
    %1016 = vdwg.mxu0
    %v1017 = vadd.f32 %v897, %v989
    %v1018 = vadd.f32 %v898, %v994
    %v1019 = vxor.u32 %v1017, 2147483648
    %v1020 = vxor.u32 %v1018, 2147483648
    %v1021 = vmul.f32 %v1019, 1.442695
    %v1022 = vpow.pop %v1021
    %v1023 = vmul.f32 %v1020, 1.442695
    %v1024 = vpow.pop %v1023
    %v1025 = vadd.f32 %v1022, 1.0
    %v1026 = vadd.f32 %v1024, 1.0
    %v1027 = vrcp.pop %v1025
    %v1028 = vmul.f32 1.0, %v1027
    %v1029 = vrcp.pop %v1026
    %v1030 = vmul.f32 1.0, %v1029
    %v1031 = vadd.f32 %v899, %v999
    %v1032 = vadd.f32 %v900, %v1004
    %v1033 = vxor.u32 %v1031, 2147483648
    %v1034 = vxor.u32 %v1032, 2147483648
    %v1035 = vmul.f32 %v1033, 1.442695
    %v1036 = vpow.pop %v1035
    %v1037 = vmul.f32 %v1034, 1.442695
    %v1038 = vpow.pop %v1037
    %v1039 = vadd.f32 %v1036, 1.0
    %v1040 = vadd.f32 %v1038, 1.0
    %v1041 = vrcp.pop %v1039
    %v1042 = vmul.f32 1.0, %v1041
    %v1043 = vrcp.pop %v1040
    %v1044 = vmul.f32 1.0, %v1043
    %v1045 = vadd.f32 %v1009, %v867
    %v1046 = vadd.f32 %v1014, %v872
    %v1047 = vmul.f32 %v1028, %v1045
    %v1048 = vmul.f32 %v1030, %v1046
    %v1049 = vadd.f32 %v901, %v1047
    %v1050 = vadd.f32 %v902, %v1048
    %v1051 = vtanh.pop %v1049
    %v1052 = vtanh.pop %v1050
    %v1053 = vsub.f32 1.0, %v1042
    %v1054 = vsub.f32 1.0, %v1044
    %v1055 = vmul.f32 %v1053, %v1051
    %v1056 = vmul.f32 %v1054, %v1052
    %v1057 = vmul.f32 %v1042, 0.0
    %v1058 = vmul.f32 %v1044, 0.0
    %v1059 = vadd.f32 %v1055, %v1057
    %v1060 = vadd.f32 %v1056, %v1058
    %v1061 = vmul.f32 %v879, %v1059
    %v1062 = vmul.f32 %v884, %v1060
    %v1063 = vadd.f32 %v1061, %v1062
    %v1064 = vrot.slane %v1063, 4
    %v1065 = vadd.f32 %v1063, %v1064
    %v1066 = vrot.slane %v1065, 2
    %v1067 = vadd.f32 %v1065, %v1066
    %v1068 = vrot.slane %v1067, 1
    %v1069 = vadd.f32 %v1067, %v1068
    %vm1070 = vcmp.gt.s32.totalorder %v896, 0
    %v1071 = vsel %vm1070, 1, 0
    %v1072 = vcvt.s32.f32 %v1071
    %v1073 = vmul.f32 %v1072, %v1069
    %v1074 = vadd.f32 %v1073, %v895
    %1075 = vst [vmem:[#allocation4] sm:$0x1] %v1074
    %v1076 = vld [vmem:[#allocation2 + $0x8] sm:$0xff]
    %v1077 = vld [vmem:[#allocation2 + $0x48] sm:$0xff]
    %v1078 = vld [vmem:[#allocation2 + $0x88] sm:$0xff]
    %v1079 = vld [vmem:[#allocation2 + $0xc8] sm:$0xff]
    %v1080 = vld [vmem:[#allocation2 + $0x108] sm:$0xff]
    %v1081 = vld [vmem:[#allocation2 + $0x148] sm:$0xff]
    %1082 = vmatprep.subr.mxu0 0.0
    %1083 = vmatpush1.msra.mxu0 0.0
    %1084 = vmatprep.subr.mxu0 0.0
    %1085 = vmatpush1.msra.mxu0 0.0
    %1086 = vmatprep.subr.mxu0 0.0
    %1087 = vmatpush1.msra.mxu0 0.0
    %1088 = vmatprep.subr.mxu0 0.0
    %1089 = vmatpush1.msra.mxu0 0.0
    %1090 = vmatprep.subr.mxu0 0.0
    %1091 = vmatpush1.msra.mxu0 0.0
    %1092 = vmatprep.subr.mxu0 0.0
    %1093 = vmatpush1.msra.mxu0 0.0
    %1094 = vmatprep.subr.mxu0 0.0
    %1095 = vmatpush1.msra.mxu0 0.0
    %1096 = vmatprep.subr.mxu0 0.0
    %1097 = vmatpush1.msra.mxu0 0.0
    %1098 = vmatprep.subr.mxu0 0.0
    %1099 = vmatpush1.msra.mxu0 0.0
    %1100 = vmatprep.subr.mxu0 0.0
    %1101 = vmatpush1.msra.mxu0 0.0
    %1102 = vmatprep.subr.mxu0 0.0
    %1103 = vmatpush1.msra.mxu0 0.0
    %1104 = vmatprep.subr.mxu0 0.0
    %1105 = vmatpush1.msra.mxu0 0.0
    %1106 = vmatprep.subr.mxu0 0.0
    %1107 = vmatpush1.msra.mxu0 0.0
    %1108 = vmatprep.subr.mxu0 0.0
    %1109 = vmatpush1.msra.mxu0 0.0
    %1110 = vmatprep.subr.mxu0 0.0
    %1111 = vmatpush1.msra.mxu0 %v1060
    %1112 = vmatprep.subr.mxu0 0.0
    %1113 = vmatpush1.msra.mxu0 %v1059
    %1114 = vmatprep.subr.mxu0 0.0
    %1115 = vmatpush2.msra.mxu0 0.0
    %1116 = vmatprep.subr.mxu0 0.0
    %1117 = vmatpush2.msra.mxu0 0.0
    %1118 = vmatprep.subr.mxu0 0.0
    %1119 = vmatpush2.msra.mxu0 0.0
    %1120 = vmatprep.subr.mxu0 0.0
    %1121 = vmatpush2.msra.mxu0 0.0
    %1122 = vmatprep.subr.mxu0 0.0
    %1123 = vmatpush2.msra.mxu0 0.0
    %1124 = vmatprep.subr.mxu0 0.0
    %1125 = vmatpush2.msra.mxu0 0.0
    %1126 = vmatprep.subr.mxu0 0.0
    %1127 = vmatpush2.msra.mxu0 0.0
    %1128 = vmatprep.subr.mxu0 0.0
    %1129 = vmatpush2.msra.mxu0 0.0
    %1130 = vmatprep.subr.mxu0 0.0
    %1131 = vmatpush2.msra.mxu0 0.0
    %1132 = vmatprep.subr.mxu0 0.0
    %1133 = vmatpush2.msra.mxu0 0.0
    %1134 = vmatprep.subr.mxu0 0.0
    %1135 = vmatpush2.msra.mxu0 0.0
    %1136 = vmatprep.subr.mxu0 0.0
    %1137 = vmatpush2.msra.mxu0 0.0
    %1138 = vmatprep.subr.mxu0 0.0
    %1139 = vmatpush2.msra.mxu0 0.0
    %1140 = vmatprep.subr.mxu0 0.0
    %1141 = vmatpush2.msra.mxu0 0.0
    %1142 = vmatprep.subr.mxu0 0.0
    %1143 = vmatpush2.msra.mxu0 0.0
    %1144 = vmatprep.subr.mxu0 0.0
    %1145 = vmatpush2.msra.mxu0 0.0
    %1146 = vmatprep.mubr.f32.mxu0 0.0
    %1147 = vmatmul.mubr.f32.gmra.mxu0 %v905
    %v1148 = vpop.f32.mrf.mxu0
    %v1149 = vadd.f32 0.0, %v1148
    %v1150 = vpop.f32.mrf.mxu0
    %1151 = vmatprep.mubr.f32.mxu0 0.0
    %1152 = vmatmul.mubr.f32.gmra.mxu0 %v908
    %v1153 = vpop.f32.mrf.mxu0
    %v1154 = vadd.f32 0.0, %v1153
    %v1155 = vpop.f32.mrf.mxu0
    %1156 = vmatprep.mubr.f32.mxu0 0.0
    %1157 = vmatmul.mubr.f32.gmra.mxu0 %v911
    %v1158 = vpop.f32.mrf.mxu0
    %v1159 = vadd.f32 0.0, %v1158
    %v1160 = vpop.f32.mrf.mxu0
    %1161 = vmatprep.mubr.f32.mxu0 0.0
    %1162 = vmatmul.mubr.f32.gmra.mxu0 %v914
    %v1163 = vpop.f32.mrf.mxu0
    %v1164 = vadd.f32 0.0, %v1163
    %v1165 = vpop.f32.mrf.mxu0
    %1166 = vmatprep.mubr.f32.mxu0 0.0
    %1167 = vmatmul.mubr.f32.gmra.mxu0 %v917
    %v1168 = vpop.f32.mrf.mxu0
    %v1169 = vadd.f32 0.0, %v1168
    %v1170 = vpop.f32.mrf.mxu0
    %1171 = vmatprep.mubr.f32.mxu0 0.0
    %1172 = vmatmul.mubr.f32.gmra.mxu0 %v920
    %v1173 = vpop.f32.mrf.mxu0
    %v1174 = vadd.f32 0.0, %v1173
    %v1175 = vpop.f32.mrf.mxu0
    %1176 = vdwg.mxu0
    %v1177 = vadd.f32 %v1076, %v1149
    %v1178 = vadd.f32 %v1077, %v1154
    %v1179 = vxor.u32 %v1177, 2147483648
    %v1180 = vxor.u32 %v1178, 2147483648
    %v1181 = vmul.f32 %v1179, 1.442695
    %v1182 = vpow.pop %v1181
    %v1183 = vmul.f32 %v1180, 1.442695
    %v1184 = vpow.pop %v1183
    %v1185 = vadd.f32 %v1182, 1.0
    %v1186 = vadd.f32 %v1184, 1.0
    %v1187 = vrcp.pop %v1185
    %v1188 = vmul.f32 1.0, %v1187
    %v1189 = vrcp.pop %v1186
    %v1190 = vmul.f32 1.0, %v1189
    %v1191 = vadd.f32 %v1078, %v1159
    %v1192 = vadd.f32 %v1079, %v1164
    %v1193 = vxor.u32 %v1191, 2147483648
    %v1194 = vxor.u32 %v1192, 2147483648
    %v1195 = vmul.f32 %v1193, 1.442695
    %v1196 = vpow.pop %v1195
    %v1197 = vmul.f32 %v1194, 1.442695
    %v1198 = vpow.pop %v1197
    %v1199 = vadd.f32 %v1196, 1.0
    %v1200 = vadd.f32 %v1198, 1.0
    %v1201 = vrcp.pop %v1199
    %v1202 = vmul.f32 1.0, %v1201
    %v1203 = vrcp.pop %v1200
    %v1204 = vmul.f32 1.0, %v1203
    %v1205 = vadd.f32 %v1169, %v867
    %v1206 = vadd.f32 %v1174, %v872
    %v1207 = vmul.f32 %v1188, %v1205
    %v1208 = vmul.f32 %v1190, %v1206
    %v1209 = vadd.f32 %v1080, %v1207
    %v1210 = vadd.f32 %v1081, %v1208
    %v1211 = vtanh.pop %v1209
    %v1212 = vtanh.pop %v1210
    %v1213 = vsub.f32 1.0, %v1202
    %v1214 = vsub.f32 1.0, %v1204
    %v1215 = vmul.f32 %v1213, %v1211
    %v1216 = vmul.f32 %v1214, %v1212
    %v1217 = vmul.f32 %v1202, %v1059
    %v1218 = vmul.f32 %v1204, %v1060
    %v1219 = vadd.f32 %v1215, %v1217
    %v1220 = vadd.f32 %v1216, %v1218
    %v1221 = vmul.f32 %v879, %v1219
    %v1222 = vmul.f32 %v884, %v1220
    %v1223 = vadd.f32 %v1221, %v1222
    %v1224 = vrot.slane %v1223, 4
    %v1225 = vadd.f32 %v1223, %v1224
    %v1226 = vrot.slane %v1225, 2
    %v1227 = vadd.f32 %v1225, %v1226
    %v1228 = vrot.slane %v1227, 1
    %v1229 = vadd.f32 %v1227, %v1228
    %vm1230 = vcmp.gt.s32.totalorder %v896, 1
    %v1231 = vsel %vm1230, 1, 0
    %v1232 = vcvt.s32.f32 %v1231
    %v1233 = vmul.f32 %v1232, %v1229
    %v1234 = vadd.f32 %v1233, %v895
    %1235 = vst [vmem:[#allocation4 + $0x1] sm:$0x1] %v1234
    %v1236 = vld [vmem:[#allocation2 + $0x10] sm:$0xff]
    %v1237 = vld [vmem:[#allocation2 + $0x50] sm:$0xff]
    %v1238 = vld [vmem:[#allocation2 + $0x90] sm:$0xff]
    %v1239 = vld [vmem:[#allocation2 + $0xd0] sm:$0xff]
    %v1240 = vld [vmem:[#allocation2 + $0x110] sm:$0xff]
    %v1241 = vld [vmem:[#allocation2 + $0x150] sm:$0xff]
    %1242 = vmatprep.subr.mxu0 0.0
    %1243 = vmatpush1.msra.mxu0 0.0
    %1244 = vmatprep.subr.mxu0 0.0
    %1245 = vmatpush1.msra.mxu0 0.0
    %1246 = vmatprep.subr.mxu0 0.0
    %1247 = vmatpush1.msra.mxu0 0.0
    %1248 = vmatprep.subr.mxu0 0.0
    %1249 = vmatpush1.msra.mxu0 0.0
    %1250 = vmatprep.subr.mxu0 0.0
    %1251 = vmatpush1.msra.mxu0 0.0
    %1252 = vmatprep.subr.mxu0 0.0
    %1253 = vmatpush1.msra.mxu0 0.0
    %1254 = vmatprep.subr.mxu0 0.0
    %1255 = vmatpush1.msra.mxu0 0.0
    %1256 = vmatprep.subr.mxu0 0.0
    %1257 = vmatpush1.msra.mxu0 0.0
    %1258 = vmatprep.subr.mxu0 0.0
    %1259 = vmatpush1.msra.mxu0 0.0
    %1260 = vmatprep.subr.mxu0 0.0
    %1261 = vmatpush1.msra.mxu0 0.0
    %1262 = vmatprep.subr.mxu0 0.0
    %1263 = vmatpush1.msra.mxu0 0.0
    %1264 = vmatprep.subr.mxu0 0.0
    %1265 = vmatpush1.msra.mxu0 0.0
    %1266 = vmatprep.subr.mxu0 0.0
    %1267 = vmatpush1.msra.mxu0 0.0
    %1268 = vmatprep.subr.mxu0 0.0
    %1269 = vmatpush1.msra.mxu0 0.0
    %1270 = vmatprep.subr.mxu0 0.0
    %1271 = vmatpush1.msra.mxu0 %v1220
    %1272 = vmatprep.subr.mxu0 0.0
    %1273 = vmatpush1.msra.mxu0 %v1219
    %1274 = vmatprep.subr.mxu0 0.0
    %1275 = vmatpush2.msra.mxu0 0.0
    %1276 = vmatprep.subr.mxu0 0.0
    %1277 = vmatpush2.msra.mxu0 0.0
    %1278 = vmatprep.subr.mxu0 0.0
    %1279 = vmatpush2.msra.mxu0 0.0
    %1280 = vmatprep.subr.mxu0 0.0
    %1281 = vmatpush2.msra.mxu0 0.0
    %1282 = vmatprep.subr.mxu0 0.0
    %1283 = vmatpush2.msra.mxu0 0.0
    %1284 = vmatprep.subr.mxu0 0.0
    %1285 = vmatpush2.msra.mxu0 0.0
    %1286 = vmatprep.subr.mxu0 0.0
    %1287 = vmatpush2.msra.mxu0 0.0
    %1288 = vmatprep.subr.mxu0 0.0
    %1289 = vmatpush2.msra.mxu0 0.0
    %1290 = vmatprep.subr.mxu0 0.0
    %1291 = vmatpush2.msra.mxu0 0.0
    %1292 = vmatprep.subr.mxu0 0.0
    %1293 = vmatpush2.msra.mxu0 0.0
    %1294 = vmatprep.subr.mxu0 0.0
    %1295 = vmatpush2.msra.mxu0 0.0
    %1296 = vmatprep.subr.mxu0 0.0
    %1297 = vmatpush2.msra.mxu0 0.0
    %1298 = vmatprep.subr.mxu0 0.0
    %1299 = vmatpush2.msra.mxu0 0.0
    %1300 = vmatprep.subr.mxu0 0.0
    %1301 = vmatpush2.msra.mxu0 0.0
    %1302 = vmatprep.subr.mxu0 0.0
    %1303 = vmatpush2.msra.mxu0 0.0
    %1304 = vmatprep.subr.mxu0 0.0
    %1305 = vmatpush2.msra.mxu0 0.0
    %1306 = vmatprep.mubr.f32.mxu0 0.0
    %1307 = vmatmul.mubr.f32.gmra.mxu0 %v905
    %v1308 = vpop.f32.mrf.mxu0
    %v1309 = vadd.f32 0.0, %v1308
    %v1310 = vpop.f32.mrf.mxu0
    %1311 = vmatprep.mubr.f32.mxu0 0.0
    %1312 = vmatmul.mubr.f32.gmra.mxu0 %v908
    %v1313 = vpop.f32.mrf.mxu0
    %v1314 = vadd.f32 0.0, %v1313
    %v1315 = vpop.f32.mrf.mxu0
    %1316 = vmatprep.mubr.f32.mxu0 0.0
    %1317 = vmatmul.mubr.f32.gmra.mxu0 %v911
    %v1318 = vpop.f32.mrf.mxu0
    %v1319 = vadd.f32 0.0, %v1318
    %v1320 = vpop.f32.mrf.mxu0
    %1321 = vmatprep.mubr.f32.mxu0 0.0
    %1322 = vmatmul.mubr.f32.gmra.mxu0 %v914
    %v1323 = vpop.f32.mrf.mxu0
    %v1324 = vadd.f32 0.0, %v1323
    %v1325 = vpop.f32.mrf.mxu0
    %1326 = vmatprep.mubr.f32.mxu0 0.0
    %1327 = vmatmul.mubr.f32.gmra.mxu0 %v917
    %v1328 = vpop.f32.mrf.mxu0
    %v1329 = vadd.f32 0.0, %v1328
    %v1330 = vpop.f32.mrf.mxu0
    %1331 = vmatprep.mubr.f32.mxu0 0.0
    %1332 = vmatmul.mubr.f32.gmra.mxu0 %v920
    %v1333 = vpop.f32.mrf.mxu0
    %v1334 = vadd.f32 0.0, %v1333
    %v1335 = vpop.f32.mrf.mxu0
    %1336 = vdwg.mxu0
    %v1337 = vadd.f32 %v1236, %v1309
    %v1338 = vadd.f32 %v1237, %v1314
    %v1339 = vxor.u32 %v1337, 2147483648
    %v1340 = vxor.u32 %v1338, 2147483648
    %v1341 = vmul.f32 %v1339, 1.442695
    %v1342 = vpow.pop %v1341
    %v1343 = vmul.f32 %v1340, 1.442695
    %v1344 = vpow.pop %v1343
    %v1345 = vadd.f32 %v1342, 1.0
    %v1346 = vadd.f32 %v1344, 1.0
    %v1347 = vrcp.pop %v1345
    %v1348 = vmul.f32 1.0, %v1347
    %v1349 = vrcp.pop %v1346
    %v1350 = vmul.f32 1.0, %v1349
    %v1351 = vadd.f32 %v1238, %v1319
    %v1352 = vadd.f32 %v1239, %v1324
    %v1353 = vxor.u32 %v1351, 2147483648
    %v1354 = vxor.u32 %v1352, 2147483648
    %v1355 = vmul.f32 %v1353, 1.442695
    %v1356 = vpow.pop %v1355
    %v1357 = vmul.f32 %v1354, 1.442695
    %v1358 = vpow.pop %v1357
    %v1359 = vadd.f32 %v1356, 1.0
    %v1360 = vadd.f32 %v1358, 1.0
    %v1361 = vrcp.pop %v1359
    %v1362 = vmul.f32 1.0, %v1361
    %v1363 = vrcp.pop %v1360
    %v1364 = vmul.f32 1.0, %v1363
    %v1365 = vadd.f32 %v1329, %v867
    %v1366 = vadd.f32 %v1334, %v872
    %v1367 = vmul.f32 %v1348, %v1365
    %v1368 = vmul.f32 %v1350, %v1366
    %v1369 = vadd.f32 %v1240, %v1367
    %v1370 = vadd.f32 %v1241, %v1368
    %v1371 = vtanh.pop %v1369
    %v1372 = vtanh.pop %v1370
    %v1373 = vsub.f32 1.0, %v1362
    %v1374 = vsub.f32 1.0, %v1364
    %v1375 = vmul.f32 %v1373, %v1371
    %v1376 = vmul.f32 %v1374, %v1372
    %v1377 = vmul.f32 %v1362, %v1219
    %v1378 = vmul.f32 %v1364, %v1220
    %v1379 = vadd.f32 %v1375, %v1377
    %v1380 = vadd.f32 %v1376, %v1378
    %v1381 = vmul.f32 %v879, %v1379
    %v1382 = vmul.f32 %v884, %v1380
    %v1383 = vadd.f32 %v1381, %v1382
    %v1384 = vrot.slane %v1383, 4
    %v1385 = vadd.f32 %v1383, %v1384
    %v1386 = vrot.slane %v1385, 2
    %v1387 = vadd.f32 %v1385, %v1386
    %v1388 = vrot.slane %v1387, 1
    %v1389 = vadd.f32 %v1387, %v1388
    %vm1390 = vcmp.gt.s32.totalorder %v896, 2
    %v1391 = vsel %vm1390, 1, 0
    %v1392 = vcvt.s32.f32 %v1391
    %v1393 = vmul.f32 %v1392, %v1389
    %v1394 = vadd.f32 %v1393, %v895
    %1395 = vst [vmem:[#allocation4 + $0x2] sm:$0x1] %v1394
    %v1396 = vld [vmem:[#allocation2 + $0x18] sm:$0xff]
    %v1397 = vld [vmem:[#allocation2 + $0x58] sm:$0xff]
    %v1398 = vld [vmem:[#allocation2 + $0x98] sm:$0xff]
    %v1399 = vld [vmem:[#allocation2 + $0xd8] sm:$0xff]
    %v1400 = vld [vmem:[#allocation2 + $0x118] sm:$0xff]
    %v1401 = vld [vmem:[#allocation2 + $0x158] sm:$0xff]
    %1402 = vmatprep.subr.mxu0 0.0
    %1403 = vmatpush1.msra.mxu0 0.0
    %1404 = vmatprep.subr.mxu0 0.0
    %1405 = vmatpush1.msra.mxu0 0.0
    %1406 = vmatprep.subr.mxu0 0.0
    %1407 = vmatpush1.msra.mxu0 0.0
    %1408 = vmatprep.subr.mxu0 0.0
    %1409 = vmatpush1.msra.mxu0 0.0
    %1410 = vmatprep.subr.mxu0 0.0
    %1411 = vmatpush1.msra.mxu0 0.0
    %1412 = vmatprep.subr.mxu0 0.0
    %1413 = vmatpush1.msra.mxu0 0.0
    %1414 = vmatprep.subr.mxu0 0.0
    %1415 = vmatpush1.msra.mxu0 0.0
    %1416 = vmatprep.subr.mxu0 0.0
    %1417 = vmatpush1.msra.mxu0 0.0
    %1418 = vmatprep.subr.mxu0 0.0
    %1419 = vmatpush1.msra.mxu0 0.0
    %1420 = vmatprep.subr.mxu0 0.0
    %1421 = vmatpush1.msra.mxu0 0.0
    %1422 = vmatprep.subr.mxu0 0.0
    %1423 = vmatpush1.msra.mxu0 0.0
    %1424 = vmatprep.subr.mxu0 0.0
    %1425 = vmatpush1.msra.mxu0 0.0
    %1426 = vmatprep.subr.mxu0 0.0
    %1427 = vmatpush1.msra.mxu0 0.0
    %1428 = vmatprep.subr.mxu0 0.0
    %1429 = vmatpush1.msra.mxu0 0.0
    %1430 = vmatprep.subr.mxu0 0.0
    %1431 = vmatpush1.msra.mxu0 %v1380
    %1432 = vmatprep.subr.mxu0 0.0
    %1433 = vmatpush1.msra.mxu0 %v1379
    %1434 = vmatprep.subr.mxu0 0.0
    %1435 = vmatpush2.msra.mxu0 0.0
    %1436 = vmatprep.subr.mxu0 0.0
    %1437 = vmatpush2.msra.mxu0 0.0
    %1438 = vmatprep.subr.mxu0 0.0
    %1439 = vmatpush2.msra.mxu0 0.0
    %1440 = vmatprep.subr.mxu0 0.0
    %1441 = vmatpush2.msra.mxu0 0.0
    %1442 = vmatprep.subr.mxu0 0.0
    %1443 = vmatpush2.msra.mxu0 0.0
    %1444 = vmatprep.subr.mxu0 0.0
    %1445 = vmatpush2.msra.mxu0 0.0
    %1446 = vmatprep.subr.mxu0 0.0
    %1447 = vmatpush2.msra.mxu0 0.0
    %1448 = vmatprep.subr.mxu0 0.0
    %1449 = vmatpush2.msra.mxu0 0.0
    %1450 = vmatprep.subr.mxu0 0.0
    %1451 = vmatpush2.msra.mxu0 0.0
    %1452 = vmatprep.subr.mxu0 0.0
    %1453 = vmatpush2.msra.mxu0 0.0
    %1454 = vmatprep.subr.mxu0 0.0
    %1455 = vmatpush2.msra.mxu0 0.0
    %1456 = vmatprep.subr.mxu0 0.0
    %1457 = vmatpush2.msra.mxu0 0.0
    %1458 = vmatprep.subr.mxu0 0.0
    %1459 = vmatpush2.msra.mxu0 0.0
    %1460 = vmatprep.subr.mxu0 0.0
    %1461 = vmatpush2.msra.mxu0 0.0
    %1462 = vmatprep.subr.mxu0 0.0
    %1463 = vmatpush2.msra.mxu0 0.0
    %1464 = vmatprep.subr.mxu0 0.0
    %1465 = vmatpush2.msra.mxu0 0.0
    %1466 = vmatprep.mubr.f32.mxu0 0.0
    %1467 = vmatmul.mubr.f32.gmra.mxu0 %v905
    %v1468 = vpop.f32.mrf.mxu0
    %v1469 = vadd.f32 0.0, %v1468
    %v1470 = vpop.f32.mrf.mxu0
    %1471 = vmatprep.mubr.f32.mxu0 0.0
    %1472 = vmatmul.mubr.f32.gmra.mxu0 %v908
    %v1473 = vpop.f32.mrf.mxu0
    %v1474 = vadd.f32 0.0, %v1473
    %v1475 = vpop.f32.mrf.mxu0
    %1476 = vmatprep.mubr.f32.mxu0 0.0
    %1477 = vmatmul.mubr.f32.gmra.mxu0 %v911
    %v1478 = vpop.f32.mrf.mxu0
    %v1479 = vadd.f32 0.0, %v1478
    %v1480 = vpop.f32.mrf.mxu0
    %1481 = vmatprep.mubr.f32.mxu0 0.0
    %1482 = vmatmul.mubr.f32.gmra.mxu0 %v914
    %v1483 = vpop.f32.mrf.mxu0
    %v1484 = vadd.f32 0.0, %v1483
    %v1485 = vpop.f32.mrf.mxu0
    %1486 = vmatprep.mubr.f32.mxu0 0.0
    %1487 = vmatmul.mubr.f32.gmra.mxu0 %v917
    %v1488 = vpop.f32.mrf.mxu0
    %v1489 = vadd.f32 0.0, %v1488
    %v1490 = vpop.f32.mrf.mxu0
    %1491 = vmatprep.mubr.f32.mxu0 0.0
    %1492 = vmatmul.mubr.f32.gmra.mxu0 %v920
    %v1493 = vpop.f32.mrf.mxu0
    %v1494 = vadd.f32 0.0, %v1493
    %v1495 = vpop.f32.mrf.mxu0
    %1496 = vdwg.mxu0
    %v1497 = vadd.f32 %v1396, %v1469
    %v1498 = vadd.f32 %v1397, %v1474
    %v1499 = vxor.u32 %v1497, 2147483648
    %v1500 = vxor.u32 %v1498, 2147483648
    %v1501 = vmul.f32 %v1499, 1.442695
    %v1502 = vpow.pop %v1501
    %v1503 = vmul.f32 %v1500, 1.442695
    %v1504 = vpow.pop %v1503
    %v1505 = vadd.f32 %v1502, 1.0
    %v1506 = vadd.f32 %v1504, 1.0
    %v1507 = vrcp.pop %v1505
    %v1508 = vmul.f32 1.0, %v1507
    %v1509 = vrcp.pop %v1506
    %v1510 = vmul.f32 1.0, %v1509
    %v1511 = vadd.f32 %v1398, %v1479
    %v1512 = vadd.f32 %v1399, %v1484
    %v1513 = vxor.u32 %v1511, 2147483648
    %v1514 = vxor.u32 %v1512, 2147483648
    %v1515 = vmul.f32 %v1513, 1.442695
    %v1516 = vpow.pop %v1515
    %v1517 = vmul.f32 %v1514, 1.442695
    %v1518 = vpow.pop %v1517
    %v1519 = vadd.f32 %v1516, 1.0
    %v1520 = vadd.f32 %v1518, 1.0
    %v1521 = vrcp.pop %v1519
    %v1522 = vmul.f32 1.0, %v1521
    %v1523 = vrcp.pop %v1520
    %v1524 = vmul.f32 1.0, %v1523
    %v1525 = vadd.f32 %v1489, %v867
    %v1526 = vadd.f32 %v1494, %v872
    %v1527 = vmul.f32 %v1508, %v1525
    %v1528 = vmul.f32 %v1510, %v1526
    %v1529 = vadd.f32 %v1400, %v1527
    %v1530 = vadd.f32 %v1401, %v1528
    %v1531 = vtanh.pop %v1529
    %v1532 = vtanh.pop %v1530
    %v1533 = vsub.f32 1.0, %v1522
    %v1534 = vsub.f32 1.0, %v1524
    %v1535 = vmul.f32 %v1533, %v1531
    %v1536 = vmul.f32 %v1534, %v1532
    %v1537 = vmul.f32 %v1522, %v1379
    %v1538 = vmul.f32 %v1524, %v1380
    %v1539 = vadd.f32 %v1535, %v1537
    %v1540 = vadd.f32 %v1536, %v1538
    %v1541 = vmul.f32 %v879, %v1539
    %v1542 = vmul.f32 %v884, %v1540
    %v1543 = vadd.f32 %v1541, %v1542
    %v1544 = vrot.slane %v1543, 4
    %v1545 = vadd.f32 %v1543, %v1544
    %v1546 = vrot.slane %v1545, 2
    %v1547 = vadd.f32 %v1545, %v1546
    %v1548 = vrot.slane %v1547, 1
    %v1549 = vadd.f32 %v1547, %v1548
    %vm1550 = vcmp.gt.s32.totalorder %v896, 3
    %v1551 = vsel %vm1550, 1, 0
    %v1552 = vcvt.s32.f32 %v1551
    %v1553 = vmul.f32 %v1552, %v1549
    %v1554 = vadd.f32 %v1553, %v895
    %1555 = vst [vmem:[#allocation4 + $0x3] sm:$0x1] %v1554
    %v1556 = vld [vmem:[#allocation2 + $0x20] sm:$0xff]
    %v1557 = vld [vmem:[#allocation2 + $0x60] sm:$0xff]
    %v1558 = vld [vmem:[#allocation2 + $0xa0] sm:$0xff]
    %v1559 = vld [vmem:[#allocation2 + $0xe0] sm:$0xff]
    %v1560 = vld [vmem:[#allocation2 + $0x120] sm:$0xff]
    %v1561 = vld [vmem:[#allocation2 + $0x160] sm:$0xff]
    %1562 = vmatprep.subr.mxu0 0.0
    %1563 = vmatpush1.msra.mxu0 0.0
    %1564 = vmatprep.subr.mxu0 0.0
    %1565 = vmatpush1.msra.mxu0 0.0
    %1566 = vmatprep.subr.mxu0 0.0
    %1567 = vmatpush1.msra.mxu0 0.0
    %1568 = vmatprep.subr.mxu0 0.0
    %1569 = vmatpush1.msra.mxu0 0.0
    %1570 = vmatprep.subr.mxu0 0.0
    %1571 = vmatpush1.msra.mxu0 0.0
    %1572 = vmatprep.subr.mxu0 0.0
    %1573 = vmatpush1.msra.mxu0 0.0
    %1574 = vmatprep.subr.mxu0 0.0
    %1575 = vmatpush1.msra.mxu0 0.0
    %1576 = vmatprep.subr.mxu0 0.0
    %1577 = vmatpush1.msra.mxu0 0.0
    %1578 = vmatprep.subr.mxu0 0.0
    %1579 = vmatpush1.msra.mxu0 0.0
    %1580 = vmatprep.subr.mxu0 0.0
    %1581 = vmatpush1.msra.mxu0 0.0
    %1582 = vmatprep.subr.mxu0 0.0
    %1583 = vmatpush1.msra.mxu0 0.0
    %1584 = vmatprep.subr.mxu0 0.0
    %1585 = vmatpush1.msra.mxu0 0.0
    %1586 = vmatprep.subr.mxu0 0.0
    %1587 = vmatpush1.msra.mxu0 0.0
    %1588 = vmatprep.subr.mxu0 0.0
    %1589 = vmatpush1.msra.mxu0 0.0
    %1590 = vmatprep.subr.mxu0 0.0
    %1591 = vmatpush1.msra.mxu0 %v1540
    %1592 = vmatprep.subr.mxu0 0.0
    %1593 = vmatpush1.msra.mxu0 %v1539
    %1594 = vmatprep.subr.mxu0 0.0
    %1595 = vmatpush2.msra.mxu0 0.0
    %1596 = vmatprep.subr.mxu0 0.0
    %1597 = vmatpush2.msra.mxu0 0.0
    %1598 = vmatprep.subr.mxu0 0.0
    %1599 = vmatpush2.msra.mxu0 0.0
    %1600 = vmatprep.subr.mxu0 0.0
    %1601 = vmatpush2.msra.mxu0 0.0
    %1602 = vmatprep.subr.mxu0 0.0
    %1603 = vmatpush2.msra.mxu0 0.0
    %1604 = vmatprep.subr.mxu0 0.0
    %1605 = vmatpush2.msra.mxu0 0.0
    %1606 = vmatprep.subr.mxu0 0.0
    %1607 = vmatpush2.msra.mxu0 0.0
    %1608 = vmatprep.subr.mxu0 0.0
    %1609 = vmatpush2.msra.mxu0 0.0
    %1610 = vmatprep.subr.mxu0 0.0
    %1611 = vmatpush2.msra.mxu0 0.0
    %1612 = vmatprep.subr.mxu0 0.0
    %1613 = vmatpush2.msra.mxu0 0.0
    %1614 = vmatprep.subr.mxu0 0.0
    %1615 = vmatpush2.msra.mxu0 0.0
    %1616 = vmatprep.subr.mxu0 0.0
    %1617 = vmatpush2.msra.mxu0 0.0
    %1618 = vmatprep.subr.mxu0 0.0
    %1619 = vmatpush2.msra.mxu0 0.0
    %1620 = vmatprep.subr.mxu0 0.0
    %1621 = vmatpush2.msra.mxu0 0.0
    %1622 = vmatprep.subr.mxu0 0.0
    %1623 = vmatpush2.msra.mxu0 0.0
    %1624 = vmatprep.subr.mxu0 0.0
    %1625 = vmatpush2.msra.mxu0 0.0
    %1626 = vmatprep.mubr.f32.mxu0 0.0
    %1627 = vmatmul.mubr.f32.gmra.mxu0 %v905
    %v1628 = vpop.f32.mrf.mxu0
    %v1629 = vadd.f32 0.0, %v1628
    %v1630 = vpop.f32.mrf.mxu0
    %1631 = vmatprep.mubr.f32.mxu0 0.0
    %1632 = vmatmul.mubr.f32.gmra.mxu0 %v908
    %v1633 = vpop.f32.mrf.mxu0
    %v1634 = vadd.f32 0.0, %v1633
    %v1635 = vpop.f32.mrf.mxu0
    %1636 = vmatprep.mubr.f32.mxu0 0.0
    %1637 = vmatmul.mubr.f32.gmra.mxu0 %v911
    %v1638 = vpop.f32.mrf.mxu0
    %v1639 = vadd.f32 0.0, %v1638
    %v1640 = vpop.f32.mrf.mxu0
    %1641 = vmatprep.mubr.f32.mxu0 0.0
    %1642 = vmatmul.mubr.f32.gmra.mxu0 %v914
    %v1643 = vpop.f32.mrf.mxu0
    %v1644 = vadd.f32 0.0, %v1643
    %v1645 = vpop.f32.mrf.mxu0
    %1646 = vmatprep.mubr.f32.mxu0 0.0
    %1647 = vmatmul.mubr.f32.gmra.mxu0 %v917
    %v1648 = vpop.f32.mrf.mxu0
    %v1649 = vadd.f32 0.0, %v1648
    %v1650 = vpop.f32.mrf.mxu0
    %1651 = vmatprep.mubr.f32.mxu0 0.0
    %1652 = vmatmul.mubr.f32.gmra.mxu0 %v920
    %v1653 = vpop.f32.mrf.mxu0
    %v1654 = vadd.f32 0.0, %v1653
    %v1655 = vpop.f32.mrf.mxu0
    %1656 = vdwg.mxu0
    %v1657 = vadd.f32 %v1556, %v1629
    %v1658 = vadd.f32 %v1557, %v1634
    %v1659 = vxor.u32 %v1657, 2147483648
    %v1660 = vxor.u32 %v1658, 2147483648
    %v1661 = vmul.f32 %v1659, 1.442695
    %v1662 = vpow.pop %v1661
    %v1663 = vmul.f32 %v1660, 1.442695
    %v1664 = vpow.pop %v1663
    %v1665 = vadd.f32 %v1662, 1.0
    %v1666 = vadd.f32 %v1664, 1.0
    %v1667 = vrcp.pop %v1665
    %v1668 = vmul.f32 1.0, %v1667
    %v1669 = vrcp.pop %v1666
    %v1670 = vmul.f32 1.0, %v1669
    %v1671 = vadd.f32 %v1558, %v1639
    %v1672 = vadd.f32 %v1559, %v1644
    %v1673 = vxor.u32 %v1671, 2147483648
    %v1674 = vxor.u32 %v1672, 2147483648
    %v1675 = vmul.f32 %v1673, 1.442695
    %v1676 = vpow.pop %v1675
    %v1677 = vmul.f32 %v1674, 1.442695
    %v1678 = vpow.pop %v1677
    %v1679 = vadd.f32 %v1676, 1.0
    %v1680 = vadd.f32 %v1678, 1.0
    %v1681 = vrcp.pop %v1679
    %v1682 = vmul.f32 1.0, %v1681
    %v1683 = vrcp.pop %v1680
    %v1684 = vmul.f32 1.0, %v1683
    %v1685 = vadd.f32 %v1649, %v867
    %v1686 = vadd.f32 %v1654, %v872
    %v1687 = vmul.f32 %v1668, %v1685
    %v1688 = vmul.f32 %v1670, %v1686
    %v1689 = vadd.f32 %v1560, %v1687
    %v1690 = vadd.f32 %v1561, %v1688
    %v1691 = vtanh.pop %v1689
    %v1692 = vtanh.pop %v1690
    %v1693 = vsub.f32 1.0, %v1682
    %v1694 = vsub.f32 1.0, %v1684
    %v1695 = vmul.f32 %v1693, %v1691
    %v1696 = vmul.f32 %v1694, %v1692
    %v1697 = vmul.f32 %v1682, %v1539
    %v1698 = vmul.f32 %v1684, %v1540
    %v1699 = vadd.f32 %v1695, %v1697
    %v1700 = vadd.f32 %v1696, %v1698
    %v1701 = vmul.f32 %v879, %v1699
    %v1702 = vmul.f32 %v884, %v1700
    %v1703 = vadd.f32 %v1701, %v1702
    %v1704 = vrot.slane %v1703, 4
    %v1705 = vadd.f32 %v1703, %v1704
    %v1706 = vrot.slane %v1705, 2
    %v1707 = vadd.f32 %v1705, %v1706
    %v1708 = vrot.slane %v1707, 1
    %v1709 = vadd.f32 %v1707, %v1708
    %vm1710 = vcmp.gt.s32.totalorder %v896, 4
    %v1711 = vsel %vm1710, 1, 0
    %v1712 = vcvt.s32.f32 %v1711
    %v1713 = vmul.f32 %v1712, %v1709
    %v1714 = vadd.f32 %v1713, %v895
    %1715 = vst [vmem:[#allocation4 + $0x4] sm:$0x1] %v1714
    %v1716 = vld [vmem:[#allocation2 + $0x28] sm:$0xff]
    %v1717 = vld [vmem:[#allocation2 + $0x68] sm:$0xff]
    %v1718 = vld [vmem:[#allocation2 + $0xa8] sm:$0xff]
    %v1719 = vld [vmem:[#allocation2 + $0xe8] sm:$0xff]
    %v1720 = vld [vmem:[#allocation2 + $0x128] sm:$0xff]
    %v1721 = vld [vmem:[#allocation2 + $0x168] sm:$0xff]
    %1722 = vmatprep.subr.mxu0 0.0
    %1723 = vmatpush1.msra.mxu0 0.0
    %1724 = vmatprep.subr.mxu0 0.0
    %1725 = vmatpush1.msra.mxu0 0.0
    %1726 = vmatprep.subr.mxu0 0.0
    %1727 = vmatpush1.msra.mxu0 0.0
    %1728 = vmatprep.subr.mxu0 0.0
    %1729 = vmatpush1.msra.mxu0 0.0
    %1730 = vmatprep.subr.mxu0 0.0
    %1731 = vmatpush1.msra.mxu0 0.0
    %1732 = vmatprep.subr.mxu0 0.0
    %1733 = vmatpush1.msra.mxu0 0.0
    %1734 = vmatprep.subr.mxu0 0.0
    %1735 = vmatpush1.msra.mxu0 0.0
    %1736 = vmatprep.subr.mxu0 0.0
    %1737 = vmatpush1.msra.mxu0 0.0
    %1738 = vmatprep.subr.mxu0 0.0
    %1739 = vmatpush1.msra.mxu0 0.0
    %1740 = vmatprep.subr.mxu0 0.0
    %1741 = vmatpush1.msra.mxu0 0.0
    %1742 = vmatprep.subr.mxu0 0.0
    %1743 = vmatpush1.msra.mxu0 0.0
    %1744 = vmatprep.subr.mxu0 0.0
    %1745 = vmatpush1.msra.mxu0 0.0
    %1746 = vmatprep.subr.mxu0 0.0
    %1747 = vmatpush1.msra.mxu0 0.0
    %1748 = vmatprep.subr.mxu0 0.0
    %1749 = vmatpush1.msra.mxu0 0.0
    %1750 = vmatprep.subr.mxu0 0.0
    %1751 = vmatpush1.msra.mxu0 %v1700
    %1752 = vmatprep.subr.mxu0 0.0
    %1753 = vmatpush1.msra.mxu0 %v1699
    %1754 = vmatprep.subr.mxu0 0.0
    %1755 = vmatpush2.msra.mxu0 0.0
    %1756 = vmatprep.subr.mxu0 0.0
    %1757 = vmatpush2.msra.mxu0 0.0
    %1758 = vmatprep.subr.mxu0 0.0
    %1759 = vmatpush2.msra.mxu0 0.0
    %1760 = vmatprep.subr.mxu0 0.0
    %1761 = vmatpush2.msra.mxu0 0.0
    %1762 = vmatprep.subr.mxu0 0.0
    %1763 = vmatpush2.msra.mxu0 0.0
    %1764 = vmatprep.subr.mxu0 0.0
    %1765 = vmatpush2.msra.mxu0 0.0
    %1766 = vmatprep.subr.mxu0 0.0
    %1767 = vmatpush2.msra.mxu0 0.0
    %1768 = vmatprep.subr.mxu0 0.0
    %1769 = vmatpush2.msra.mxu0 0.0
    %1770 = vmatprep.subr.mxu0 0.0
    %1771 = vmatpush2.msra.mxu0 0.0
    %1772 = vmatprep.subr.mxu0 0.0
    %1773 = vmatpush2.msra.mxu0 0.0
    %1774 = vmatprep.subr.mxu0 0.0
    %1775 = vmatpush2.msra.mxu0 0.0
    %1776 = vmatprep.subr.mxu0 0.0
    %1777 = vmatpush2.msra.mxu0 0.0
    %1778 = vmatprep.subr.mxu0 0.0
    %1779 = vmatpush2.msra.mxu0 0.0
    %1780 = vmatprep.subr.mxu0 0.0
    %1781 = vmatpush2.msra.mxu0 0.0
    %1782 = vmatprep.subr.mxu0 0.0
    %1783 = vmatpush2.msra.mxu0 0.0
    %1784 = vmatprep.subr.mxu0 0.0
    %1785 = vmatpush2.msra.mxu0 0.0
    %1786 = vmatprep.mubr.f32.mxu0 0.0
    %1787 = vmatmul.mubr.f32.gmra.mxu0 %v905
    %v1788 = vpop.f32.mrf.mxu0
    %v1789 = vadd.f32 0.0, %v1788
    %v1790 = vpop.f32.mrf.mxu0
    %1791 = vmatprep.mubr.f32.mxu0 0.0
    %1792 = vmatmul.mubr.f32.gmra.mxu0 %v908
    %v1793 = vpop.f32.mrf.mxu0
    %v1794 = vadd.f32 0.0, %v1793
    %v1795 = vpop.f32.mrf.mxu0
    %1796 = vmatprep.mubr.f32.mxu0 0.0
    %1797 = vmatmul.mubr.f32.gmra.mxu0 %v911
    %v1798 = vpop.f32.mrf.mxu0
    %v1799 = vadd.f32 0.0, %v1798
    %v1800 = vpop.f32.mrf.mxu0
    %1801 = vmatprep.mubr.f32.mxu0 0.0
    %1802 = vmatmul.mubr.f32.gmra.mxu0 %v914
    %v1803 = vpop.f32.mrf.mxu0
    %v1804 = vadd.f32 0.0, %v1803
    %v1805 = vpop.f32.mrf.mxu0
    %1806 = vmatprep.mubr.f32.mxu0 0.0
    %1807 = vmatmul.mubr.f32.gmra.mxu0 %v917
    %v1808 = vpop.f32.mrf.mxu0
    %v1809 = vadd.f32 0.0, %v1808
    %v1810 = vpop.f32.mrf.mxu0
    %1811 = vmatprep.mubr.f32.mxu0 0.0
    %1812 = vmatmul.mubr.f32.gmra.mxu0 %v920
    %v1813 = vpop.f32.mrf.mxu0
    %v1814 = vadd.f32 0.0, %v1813
    %v1815 = vpop.f32.mrf.mxu0
    %1816 = vdwg.mxu0
    %v1817 = vadd.f32 %v1716, %v1789
    %v1818 = vadd.f32 %v1717, %v1794
    %v1819 = vxor.u32 %v1817, 2147483648
    %v1820 = vxor.u32 %v1818, 2147483648
    %v1821 = vmul.f32 %v1819, 1.442695
    %v1822 = vpow.pop %v1821
    %v1823 = vmul.f32 %v1820, 1.442695
    %v1824 = vpow.pop %v1823
    %v1825 = vadd.f32 %v1822, 1.0
    %v1826 = vadd.f32 %v1824, 1.0
    %v1827 = vrcp.pop %v1825
    %v1828 = vmul.f32 1.0, %v1827
    %v1829 = vrcp.pop %v1826
    %v1830 = vmul.f32 1.0, %v1829
    %v1831 = vadd.f32 %v1718, %v1799
    %v1832 = vadd.f32 %v1719, %v1804
    %v1833 = vxor.u32 %v1831, 2147483648
    %v1834 = vxor.u32 %v1832, 2147483648
    %v1835 = vmul.f32 %v1833, 1.442695
    %v1836 = vpow.pop %v1835
    %v1837 = vmul.f32 %v1834, 1.442695
    %v1838 = vpow.pop %v1837
    %v1839 = vadd.f32 %v1836, 1.0
    %v1840 = vadd.f32 %v1838, 1.0
    %v1841 = vrcp.pop %v1839
    %v1842 = vmul.f32 1.0, %v1841
    %v1843 = vrcp.pop %v1840
    %v1844 = vmul.f32 1.0, %v1843
    %v1845 = vadd.f32 %v1809, %v867
    %v1846 = vadd.f32 %v1814, %v872
    %v1847 = vmul.f32 %v1828, %v1845
    %v1848 = vmul.f32 %v1830, %v1846
    %v1849 = vadd.f32 %v1720, %v1847
    %v1850 = vadd.f32 %v1721, %v1848
    %v1851 = vtanh.pop %v1849
    %v1852 = vtanh.pop %v1850
    %v1853 = vsub.f32 1.0, %v1842
    %v1854 = vsub.f32 1.0, %v1844
    %v1855 = vmul.f32 %v1853, %v1851
    %v1856 = vmul.f32 %v1854, %v1852
    %v1857 = vmul.f32 %v1842, %v1699
    %v1858 = vmul.f32 %v1844, %v1700
    %v1859 = vadd.f32 %v1855, %v1857
    %v1860 = vadd.f32 %v1856, %v1858
    %v1861 = vmul.f32 %v879, %v1859
    %v1862 = vmul.f32 %v884, %v1860
    %v1863 = vadd.f32 %v1861, %v1862
    %v1864 = vrot.slane %v1863, 4
    %v1865 = vadd.f32 %v1863, %v1864
    %v1866 = vrot.slane %v1865, 2
    %v1867 = vadd.f32 %v1865, %v1866
    %v1868 = vrot.slane %v1867, 1
    %v1869 = vadd.f32 %v1867, %v1868
    %vm1870 = vcmp.gt.s32.totalorder %v896, 5
    %v1871 = vsel %vm1870, 1, 0
    %v1872 = vcvt.s32.f32 %v1871
    %v1873 = vmul.f32 %v1872, %v1869
    %v1874 = vadd.f32 %v1873, %v895
    %1875 = vst [vmem:[#allocation4 + $0x5] sm:$0x1] %v1874
    %v1876 = vld [vmem:[#allocation2 + $0x30] sm:$0xff]
    %v1877 = vld [vmem:[#allocation2 + $0x70] sm:$0xff]
    %v1878 = vld [vmem:[#allocation2 + $0xb0] sm:$0xff]
    %v1879 = vld [vmem:[#allocation2 + $0xf0] sm:$0xff]
    %v1880 = vld [vmem:[#allocation2 + $0x130] sm:$0xff]
    %v1881 = vld [vmem:[#allocation2 + $0x170] sm:$0xff]
    %1882 = vmatprep.subr.mxu0 0.0
    %1883 = vmatpush1.msra.mxu0 0.0
    %1884 = vmatprep.subr.mxu0 0.0
    %1885 = vmatpush1.msra.mxu0 0.0
    %1886 = vmatprep.subr.mxu0 0.0
    %1887 = vmatpush1.msra.mxu0 0.0
    %1888 = vmatprep.subr.mxu0 0.0
    %1889 = vmatpush1.msra.mxu0 0.0
    %1890 = vmatprep.subr.mxu0 0.0
    %1891 = vmatpush1.msra.mxu0 0.0
    %1892 = vmatprep.subr.mxu0 0.0
    %1893 = vmatpush1.msra.mxu0 0.0
    %1894 = vmatprep.subr.mxu0 0.0
    %1895 = vmatpush1.msra.mxu0 0.0
    %1896 = vmatprep.subr.mxu0 0.0
    %1897 = vmatpush1.msra.mxu0 0.0
    %1898 = vmatprep.subr.mxu0 0.0
    %1899 = vmatpush1.msra.mxu0 0.0
    %1900 = vmatprep.subr.mxu0 0.0
    %1901 = vmatpush1.msra.mxu0 0.0
    %1902 = vmatprep.subr.mxu0 0.0
    %1903 = vmatpush1.msra.mxu0 0.0
    %1904 = vmatprep.subr.mxu0 0.0
    %1905 = vmatpush1.msra.mxu0 0.0
    %1906 = vmatprep.subr.mxu0 0.0
    %1907 = vmatpush1.msra.mxu0 0.0
    %1908 = vmatprep.subr.mxu0 0.0
    %1909 = vmatpush1.msra.mxu0 0.0
    %1910 = vmatprep.subr.mxu0 0.0
    %1911 = vmatpush1.msra.mxu0 %v1860
    %1912 = vmatprep.subr.mxu0 0.0
    %1913 = vmatpush1.msra.mxu0 %v1859
    %1914 = vmatprep.subr.mxu0 0.0
    %1915 = vmatpush2.msra.mxu0 0.0
    %1916 = vmatprep.subr.mxu0 0.0
    %1917 = vmatpush2.msra.mxu0 0.0
    %1918 = vmatprep.subr.mxu0 0.0
    %1919 = vmatpush2.msra.mxu0 0.0
    %1920 = vmatprep.subr.mxu0 0.0
    %1921 = vmatpush2.msra.mxu0 0.0
    %1922 = vmatprep.subr.mxu0 0.0
    %1923 = vmatpush2.msra.mxu0 0.0
    %1924 = vmatprep.subr.mxu0 0.0
    %1925 = vmatpush2.msra.mxu0 0.0
    %1926 = vmatprep.subr.mxu0 0.0
    %1927 = vmatpush2.msra.mxu0 0.0
    %1928 = vmatprep.subr.mxu0 0.0
    %1929 = vmatpush2.msra.mxu0 0.0
    %1930 = vmatprep.subr.mxu0 0.0
    %1931 = vmatpush2.msra.mxu0 0.0
    %1932 = vmatprep.subr.mxu0 0.0
    %1933 = vmatpush2.msra.mxu0 0.0
    %1934 = vmatprep.subr.mxu0 0.0
    %1935 = vmatpush2.msra.mxu0 0.0
    %1936 = vmatprep.subr.mxu0 0.0
    %1937 = vmatpush2.msra.mxu0 0.0
    %1938 = vmatprep.subr.mxu0 0.0
    %1939 = vmatpush2.msra.mxu0 0.0
    %1940 = vmatprep.subr.mxu0 0.0
    %1941 = vmatpush2.msra.mxu0 0.0
    %1942 = vmatprep.subr.mxu0 0.0
    %1943 = vmatpush2.msra.mxu0 0.0
    %1944 = vmatprep.subr.mxu0 0.0
    %1945 = vmatpush2.msra.mxu0 0.0
    %1946 = vmatprep.mubr.f32.mxu0 0.0
    %1947 = vmatmul.mubr.f32.gmra.mxu0 %v905
    %v1948 = vpop.f32.mrf.mxu0
    %v1949 = vadd.f32 0.0, %v1948
    %v1950 = vpop.f32.mrf.mxu0
    %1951 = vmatprep.mubr.f32.mxu0 0.0
    %1952 = vmatmul.mubr.f32.gmra.mxu0 %v908
    %v1953 = vpop.f32.mrf.mxu0
    %v1954 = vadd.f32 0.0, %v1953
    %v1955 = vpop.f32.mrf.mxu0
    %1956 = vmatprep.mubr.f32.mxu0 0.0
    %1957 = vmatmul.mubr.f32.gmra.mxu0 %v911
    %v1958 = vpop.f32.mrf.mxu0
    %v1959 = vadd.f32 0.0, %v1958
    %v1960 = vpop.f32.mrf.mxu0
    %1961 = vmatprep.mubr.f32.mxu0 0.0
    %1962 = vmatmul.mubr.f32.gmra.mxu0 %v914
    %v1963 = vpop.f32.mrf.mxu0
    %v1964 = vadd.f32 0.0, %v1963
    %v1965 = vpop.f32.mrf.mxu0
    %1966 = vmatprep.mubr.f32.mxu0 0.0
    %1967 = vmatmul.mubr.f32.gmra.mxu0 %v917
    %v1968 = vpop.f32.mrf.mxu0
    %v1969 = vadd.f32 0.0, %v1968
    %v1970 = vpop.f32.mrf.mxu0
    %1971 = vmatprep.mubr.f32.mxu0 0.0
    %1972 = vmatmul.mubr.f32.gmra.mxu0 %v920
    %v1973 = vpop.f32.mrf.mxu0
    %v1974 = vadd.f32 0.0, %v1973
    %v1975 = vpop.f32.mrf.mxu0
    %1976 = vdwg.mxu0
    %v1977 = vadd.f32 %v1876, %v1949
    %v1978 = vadd.f32 %v1877, %v1954
    %v1979 = vxor.u32 %v1977, 2147483648
    %v1980 = vxor.u32 %v1978, 2147483648
    %v1981 = vmul.f32 %v1979, 1.442695
    %v1982 = vpow.pop %v1981
    %v1983 = vmul.f32 %v1980, 1.442695
    %v1984 = vpow.pop %v1983
    %v1985 = vadd.f32 %v1982, 1.0
    %v1986 = vadd.f32 %v1984, 1.0
    %v1987 = vrcp.pop %v1985
    %v1988 = vmul.f32 1.0, %v1987
    %v1989 = vrcp.pop %v1986
    %v1990 = vmul.f32 1.0, %v1989
    %v1991 = vadd.f32 %v1878, %v1959
    %v1992 = vadd.f32 %v1879, %v1964
    %v1993 = vxor.u32 %v1991, 2147483648
    %v1994 = vxor.u32 %v1992, 2147483648
    %v1995 = vmul.f32 %v1993, 1.442695
    %v1996 = vpow.pop %v1995
    %v1997 = vmul.f32 %v1994, 1.442695
    %v1998 = vpow.pop %v1997
    %v1999 = vadd.f32 %v1996, 1.0
    %v2000 = vadd.f32 %v1998, 1.0
    %v2001 = vrcp.pop %v1999
    %v2002 = vmul.f32 1.0, %v2001
    %v2003 = vrcp.pop %v2000
    %v2004 = vmul.f32 1.0, %v2003
    %v2005 = vadd.f32 %v1969, %v867
    %v2006 = vadd.f32 %v1974, %v872
    %v2007 = vmul.f32 %v1988, %v2005
    %v2008 = vmul.f32 %v1990, %v2006
    %v2009 = vadd.f32 %v1880, %v2007
    %v2010 = vadd.f32 %v1881, %v2008
    %v2011 = vtanh.pop %v2009
    %v2012 = vtanh.pop %v2010
    %v2013 = vsub.f32 1.0, %v2002
    %v2014 = vsub.f32 1.0, %v2004
    %v2015 = vmul.f32 %v2013, %v2011
    %v2016 = vmul.f32 %v2014, %v2012
    %v2017 = vmul.f32 %v2002, %v1859
    %v2018 = vmul.f32 %v2004, %v1860
    %v2019 = vadd.f32 %v2015, %v2017
    %v2020 = vadd.f32 %v2016, %v2018
    %v2021 = vmul.f32 %v879, %v2019
    %v2022 = vmul.f32 %v884, %v2020
    %v2023 = vadd.f32 %v2021, %v2022
    %v2024 = vrot.slane %v2023, 4
    %v2025 = vadd.f32 %v2023, %v2024
    %v2026 = vrot.slane %v2025, 2
    %v2027 = vadd.f32 %v2025, %v2026
    %v2028 = vrot.slane %v2027, 1
    %v2029 = vadd.f32 %v2027, %v2028
    %vm2030 = vcmp.gt.s32.totalorder %v896, 6
    %v2031 = vsel %vm2030, 1, 0
    %v2032 = vcvt.s32.f32 %v2031
    %v2033 = vmul.f32 %v2032, %v2029
    %v2034 = vadd.f32 %v2033, %v895
    %2035 = vst [vmem:[#allocation4 + $0x6] sm:$0x1] %v2034
    %v2036 = vld [vmem:[#allocation2 + $0x38] sm:$0xff]
    %v2037 = vld [vmem:[#allocation2 + $0x78] sm:$0xff]
    %v2038 = vld [vmem:[#allocation2 + $0xb8] sm:$0xff]
    %v2039 = vld [vmem:[#allocation2 + $0xf8] sm:$0xff]
    %v2040 = vld [vmem:[#allocation2 + $0x138] sm:$0xff]
    %v2041 = vld [vmem:[#allocation2 + $0x178] sm:$0xff]
    %2042 = vmatprep.subr.mxu0 0.0
    %2043 = vmatpush1.msra.mxu0 0.0
    %2044 = vmatprep.subr.mxu0 0.0
    %2045 = vmatpush1.msra.mxu0 0.0
    %2046 = vmatprep.subr.mxu0 0.0
    %2047 = vmatpush1.msra.mxu0 0.0
    %2048 = vmatprep.subr.mxu0 0.0
    %2049 = vmatpush1.msra.mxu0 0.0
    %2050 = vmatprep.subr.mxu0 0.0
    %2051 = vmatpush1.msra.mxu0 0.0
    %2052 = vmatprep.subr.mxu0 0.0
    %2053 = vmatpush1.msra.mxu0 0.0
    %2054 = vmatprep.subr.mxu0 0.0
    %2055 = vmatpush1.msra.mxu0 0.0
    %2056 = vmatprep.subr.mxu0 0.0
    %2057 = vmatpush1.msra.mxu0 0.0
    %2058 = vmatprep.subr.mxu0 0.0
    %2059 = vmatpush1.msra.mxu0 0.0
    %2060 = vmatprep.subr.mxu0 0.0
    %2061 = vmatpush1.msra.mxu0 0.0
    %2062 = vmatprep.subr.mxu0 0.0
    %2063 = vmatpush1.msra.mxu0 0.0
    %2064 = vmatprep.subr.mxu0 0.0
    %2065 = vmatpush1.msra.mxu0 0.0
    %2066 = vmatprep.subr.mxu0 0.0
    %2067 = vmatpush1.msra.mxu0 0.0
    %2068 = vmatprep.subr.mxu0 0.0
    %2069 = vmatpush1.msra.mxu0 0.0
    %2070 = vmatprep.subr.mxu0 0.0
    %2071 = vmatpush1.msra.mxu0 %v2020
    %2072 = vmatprep.subr.mxu0 0.0
    %2073 = vmatpush1.msra.mxu0 %v2019
    %2074 = vmatprep.subr.mxu0 0.0
    %2075 = vmatpush2.msra.mxu0 0.0
    %2076 = vmatprep.subr.mxu0 0.0
    %2077 = vmatpush2.msra.mxu0 0.0
    %2078 = vmatprep.subr.mxu0 0.0
    %2079 = vmatpush2.msra.mxu0 0.0
    %2080 = vmatprep.subr.mxu0 0.0
    %2081 = vmatpush2.msra.mxu0 0.0
    %2082 = vmatprep.subr.mxu0 0.0
    %2083 = vmatpush2.msra.mxu0 0.0
    %2084 = vmatprep.subr.mxu0 0.0
    %2085 = vmatpush2.msra.mxu0 0.0
    %2086 = vmatprep.subr.mxu0 0.0
    %2087 = vmatpush2.msra.mxu0 0.0
    %2088 = vmatprep.subr.mxu0 0.0
    %2089 = vmatpush2.msra.mxu0 0.0
    %2090 = vmatprep.subr.mxu0 0.0
    %2091 = vmatpush2.msra.mxu0 0.0
    %2092 = vmatprep.subr.mxu0 0.0
    %2093 = vmatpush2.msra.mxu0 0.0
    %2094 = vmatprep.subr.mxu0 0.0
    %2095 = vmatpush2.msra.mxu0 0.0
    %2096 = vmatprep.subr.mxu0 0.0
    %2097 = vmatpush2.msra.mxu0 0.0
    %2098 = vmatprep.subr.mxu0 0.0
    %2099 = vmatpush2.msra.mxu0 0.0
    %2100 = vmatprep.subr.mxu0 0.0
    %2101 = vmatpush2.msra.mxu0 0.0
    %2102 = vmatprep.subr.mxu0 0.0
    %2103 = vmatpush2.msra.mxu0 0.0
    %2104 = vmatprep.subr.mxu0 0.0
    %2105 = vmatpush2.msra.mxu0 0.0
    %2106 = vmatprep.mubr.f32.mxu0 0.0
    %2107 = vmatmul.mubr.f32.gmra.mxu0 %v905
    %v2108 = vpop.f32.mrf.mxu0
    %v2109 = vadd.f32 0.0, %v2108
    %v2110 = vpop.f32.mrf.mxu0
    %2111 = vmatprep.mubr.f32.mxu0 0.0
    %2112 = vmatmul.mubr.f32.gmra.mxu0 %v908
    %v2113 = vpop.f32.mrf.mxu0
    %v2114 = vadd.f32 0.0, %v2113
    %v2115 = vpop.f32.mrf.mxu0
    %2116 = vmatprep.mubr.f32.mxu0 0.0
    %2117 = vmatmul.mubr.f32.gmra.mxu0 %v911
    %v2118 = vpop.f32.mrf.mxu0
    %v2119 = vadd.f32 0.0, %v2118
    %v2120 = vpop.f32.mrf.mxu0
    %2121 = vmatprep.mubr.f32.mxu0 0.0
    %2122 = vmatmul.mubr.f32.gmra.mxu0 %v914
    %v2123 = vpop.f32.mrf.mxu0
    %v2124 = vadd.f32 0.0, %v2123
    %v2125 = vpop.f32.mrf.mxu0
    %2126 = vmatprep.mubr.f32.mxu0 0.0
    %2127 = vmatmul.mubr.f32.gmra.mxu0 %v917
    %v2128 = vpop.f32.mrf.mxu0
    %v2129 = vadd.f32 0.0, %v2128
    %v2130 = vpop.f32.mrf.mxu0
    %2131 = vmatprep.mubr.f32.mxu0 0.0
    %2132 = vmatmul.mubr.f32.gmra.mxu0 %v920
    %v2133 = vpop.f32.mrf.mxu0
    %v2134 = vadd.f32 0.0, %v2133
    %v2135 = vpop.f32.mrf.mxu0
    %2136 = vdwg.mxu0
    %v2137 = vadd.f32 %v2036, %v2109
    %v2138 = vadd.f32 %v2037, %v2114
    %v2139 = vxor.u32 %v2137, 2147483648
    %v2140 = vxor.u32 %v2138, 2147483648
    %v2141 = vmul.f32 %v2139, 1.442695
    %v2142 = vpow.pop %v2141
    %v2143 = vmul.f32 %v2140, 1.442695
    %v2144 = vpow.pop %v2143
    %v2145 = vadd.f32 %v2142, 1.0
    %v2146 = vadd.f32 %v2144, 1.0
    %v2147 = vrcp.pop %v2145
    %v2148 = vmul.f32 1.0, %v2147
    %v2149 = vrcp.pop %v2146
    %v2150 = vmul.f32 1.0, %v2149
    %v2151 = vadd.f32 %v2038, %v2119
    %v2152 = vadd.f32 %v2039, %v2124
    %v2153 = vxor.u32 %v2151, 2147483648
    %v2154 = vxor.u32 %v2152, 2147483648
    %v2155 = vmul.f32 %v2153, 1.442695
    %v2156 = vpow.pop %v2155
    %v2157 = vmul.f32 %v2154, 1.442695
    %v2158 = vpow.pop %v2157
    %v2159 = vadd.f32 %v2156, 1.0
    %v2160 = vadd.f32 %v2158, 1.0
    %v2161 = vrcp.pop %v2159
    %v2162 = vmul.f32 1.0, %v2161
    %v2163 = vrcp.pop %v2160
    %v2164 = vmul.f32 1.0, %v2163
    %v2165 = vadd.f32 %v2129, %v867
    %v2166 = vadd.f32 %v2134, %v872
    %v2167 = vmul.f32 %v2148, %v2165
    %v2168 = vmul.f32 %v2150, %v2166
    %v2169 = vadd.f32 %v2040, %v2167
    %v2170 = vadd.f32 %v2041, %v2168
    %v2171 = vtanh.pop %v2169
    %v2172 = vtanh.pop %v2170
    %v2173 = vsub.f32 1.0, %v2162
    %v2174 = vsub.f32 1.0, %v2164
    %v2175 = vmul.f32 %v2173, %v2171
    %v2176 = vmul.f32 %v2174, %v2172
    %v2177 = vmul.f32 %v2162, %v2019
    %v2178 = vmul.f32 %v2164, %v2020
    %v2179 = vadd.f32 %v2175, %v2177
    %v2180 = vadd.f32 %v2176, %v2178
    %v2181 = vmul.f32 %v879, %v2179
    %v2182 = vmul.f32 %v884, %v2180
    %v2183 = vadd.f32 %v2181, %v2182
    %v2184 = vrot.slane %v2183, 4
    %v2185 = vadd.f32 %v2183, %v2184
    %v2186 = vrot.slane %v2185, 2
    %v2187 = vadd.f32 %v2185, %v2186
    %v2188 = vrot.slane %v2187, 1
    %v2189 = vadd.f32 %v2187, %v2188
    %vm2190 = vcmp.gt.s32.totalorder %v896, 7
    %v2191 = vsel %vm2190, 1, 0
    %v2192 = vcvt.s32.f32 %v2191
    %v2193 = vmul.f32 %v2192, %v2189
    %v2194 = vadd.f32 %v2193, %v895
    %2195 = vst [vmem:[#allocation4 + $0x7] sm:$0x1] %v2194
    // Predicated region
    $region42: #{tpu_custom_call.1} parent=1 // pred_check
      _
    $region43: #{tpu_custom_call.1} parent=1 // pred_check_branch
      %2197 = sbr.rel (0) target = $region45
    $region44: #{tpu_custom_call.1} parent=1 // pred_region
      %s2199 = ssub.s32 128, 128
      %2200 = vsyncadd [#allocation5], %s2199
      %s2202 = sshll.u32 [#allocation4], 4
      %s2203 = int_to_ptr.vmem [resolvable:$true] %s2202
      %2205 = dma.vmem_to_hbm [thread:$0]  %s2203, 128, %s10, [#allocation5]
    $region45: #{tpu_custom_call.1} parent=1 // pred_fallthru
      _
    // Predicated region
    $region46: #{tpu_custom_call.1} parent=1 // pred_check
      _
    $region47: #{tpu_custom_call.1} parent=1 // pred_check_branch
      %2207 = sbr.rel (0) target = $region49
    $region48: #{tpu_custom_call.1} parent=1 // pred_region
      %2208 = dma.done [#allocation5], 128
    $region49: #{tpu_custom_call.1} parent=1 // pred_fallthru
      _
    %2209 = vsyncpa [#allocation5], 1

</llo_original>
